<compile_context>
chip_gen: v7x
topology: tpu7x:2x2x1
jax: 0.10.0
libtpu: 0.0.40
codegen_flags: <defaults>
</compile_context>

<pallas_src>
import math
import functools

import jax
import jax.numpy as jnp
from jax.experimental import pallas as pl
from jax.experimental.pallas import tpu as pltpu


# ----------------------------- Pallas kernel ------------------------------- #

def _layernorm(x, g, b, eps=1e-12):
    mean = jnp.mean(x, axis=-1, keepdims=True)
    var = jnp.mean((x - mean) ** 2, axis=-1, keepdims=True)
    return (x - mean) * jax.lax.rsqrt(var + eps) * g + b


def _gelu_tanh(x):
    # TODO(synk): HF BERT default is exact erf GELU; tanh approximation kept
    # (maps to the EUP tanh unit), deviation is ~1e-3 relative.
    c = math.sqrt(2.0 / math.pi)
    return 0.5 * x * (1.0 + jnp.tanh(c * (x + 0.044715 * x * x * x)))


def encoder_layer_kernel(
    x_ref, bias_ref,
    wqkv_ref, bqkv_ref, wo_ref, bo_ref,
    ln1g_ref, ln1b_ref, w1_ref, b1_ref, w2_ref, b2_ref, ln2g_ref, ln2b_ref,
    pooled_ref,
    *, rep_pos,
):
    Bblk, S, H = x_ref.shape
    x = x_ref[...]                       # (Bblk, S, H) f32
    bias = bias_ref[...]                 # (Bblk, 1, S) f32 additive attention mask

    scale = 1.0 / math.sqrt(H)

    # ---- fused QKV projection on the flattened (Bblk*S, H) slab (bf16 MXU) ----
    x2 = x.reshape(Bblk * S, H)
    xb = x2.astype(jnp.bfloat16)
    qkv = jnp.dot(xb, wqkv_ref[...], preferred_element_type=jnp.float32) + bqkv_ref[...]
    q = qkv[:, 0 * H:1 * H].reshape(Bblk, S, H).astype(jnp.bfloat16)
    k = qkv[:, 1 * H:2 * H].reshape(Bblk, S, H).astype(jnp.bfloat16)
    v = qkv[:, 2 * H:3 * H].reshape(Bblk, S, H).astype(jnp.bfloat16)

    # ---- single-head self attention (batched, contraction on last dim) ----
    # TODO(synk): real BERT is multi-head with scale 1/sqrt(head_dim); the
    # single-head simplification is intentional for this port.
    scores = jnp.einsum('bqd,bkd->bqk', q, k,
                        preferred_element_type=jnp.float32) * scale + bias
    scores = scores - jnp.max(scores, axis=-1, keepdims=True)
    p = jnp.exp(scores)
    p = p * pl.reciprocal(jnp.sum(p, axis=-1, keepdims=True), approx=True)
    attn = jnp.einsum('bqk,bkd->bqd', p.astype(jnp.bfloat16), v,
                      preferred_element_type=jnp.float32)

    attn2 = attn.reshape(Bblk * S, H).astype(jnp.bfloat16)
    attn_out = jnp.dot(attn2, wo_ref[...], preferred_element_type=jnp.float32) + bo_ref[...]

    h = _layernorm(x2 + attn_out, ln1g_ref[...], ln1b_ref[...])

    # ---- FFN (bf16 MXU inputs, f32 accumulation / activation) ----
    ffn = jnp.dot(h.astype(jnp.bfloat16), w1_ref[...],
                  preferred_element_type=jnp.float32) + b1_ref[...]
    ffn = _gelu_tanh(ffn)
    ffn = jnp.dot(ffn.astype(jnp.bfloat16), w2_ref[...],
                  preferred_element_type=jnp.float32) + b2_ref[...]

    out = _layernorm(h + ffn, ln2g_ref[...], ln2b_ref[...]).reshape(Bblk, S, H)

    # pooled output = sequence_output[:, representation_token_pos, :]
    pooled_ref[...] = out[:, rep_pos:rep_pos + 1, :].astype(pooled_ref.dtype)


def run_encoder_layer(x_emb, attn_mask, kp, rep_pos=0):
    """x_emb: (B, S, H) f32, attn_mask: (B, S) float {0,1}. Returns pooled (B, H)."""
    B, S, H = x_emb.shape
    F = kp["w1"].shape[1]

    # additive mask bias, broadcast over query rows inside the kernel
    bias = ((1.0 - attn_mask.astype(jnp.float32)) * -1e9).reshape(B, 1, S)

    # 2 grid steps so the v7x megacore can split the batch across its two
    # TensorCores; each step processes the whole (Bblk*S, H) slab at once.
    n_chunks = 2 if (B >= 2 and B % 2 == 0) else 1
    bblk = B // n_chunks

    # TODO(synk): at real BERT sizes (H=768, F=3072) mark these grid-invariant
    # weight specs single-buffered (pipeline_mode=pl.Buffered(1)) to halve their
    # VMEM footprint; irrelevant at these toy sizes.
    full = lambda shape: pl.BlockSpec(shape, lambda g: tuple(0 for _ in shape))

    in_specs = [
        pl.BlockSpec((bblk, S, H), lambda g: (g, 0, 0)),   # x
        pl.BlockSpec((bblk, 1, S), lambda g: (g, 0, 0)),   # mask bias
        full((H, 3 * H)), full((1, 3 * H)),                # fused wqkv, bqkv
        full((H, H)), full((1, H)),                        # wo, bo
        full((1, H)), full((1, H)),                        # ln1 g, b
        full((H, F)), full((1, F)),                        # w1, b1
        full((F, H)), full((1, H)),                        # w2, b2
        full((1, H)), full((1, H)),                        # ln2 g, b
    ]
    out_specs = pl.BlockSpec((bblk, 1, H), lambda g: (g, 0, 0))
    out_shape = jax.ShapeDtypeStruct((B, 1, H), jnp.float32)

    pooled = pl.pallas_call(
        functools.partial(encoder_layer_kernel, rep_pos=rep_pos),
        grid=(n_chunks,),
        in_specs=in_specs,
        out_specs=out_specs,
        out_shape=out_shape,
        compiler_params=pltpu.CompilerParams(
            dimension_semantics=("parallel",),
            vmem_limit_bytes=64 * 1024 * 1024),
    )(
        x_emb, bias,
        kp["wqkv"], kp["bqkv"], kp["wo"], kp["bo"],
        kp["ln1_g"], kp["ln1_b"],
        kp["w1"], kp["b1"], kp["w2"], kp["b2"],
        kp["ln2_g"], kp["ln2_b"],
    )
    return pooled[:, 0, :]


# ------------------------- parameter construction -------------------------- #

def init_encoder_params(key, hidden, ffn, vocab, n_segments, max_pos, relational=False,
                        n_rel=16):
    keys = jax.random.split(key, 16)
    s = 0.02
    p = {
        "tok_emb": jax.random.normal(keys[0], (vocab, hidden), jnp.float32) * s,
        "seg_emb": jax.random.normal(keys[1], (n_segments, hidden), jnp.float32) * s,
        "pos_emb": jax.random.normal(keys[2], (max_pos, hidden), jnp.float32) * s,
        "wq": jax.random.normal(keys[3], (hidden, hidden), jnp.float32) * s,
        "bq": jnp.zeros((1, hidden), jnp.float32),
        "wk": jax.random.normal(keys[4], (hidden, hidden), jnp.float32) * s,
        "bk": jnp.zeros((1, hidden), jnp.float32),
        "wv": jax.random.normal(keys[5], (hidden, hidden), jnp.float32) * s,
        "bv": jnp.zeros((1, hidden), jnp.float32),
        "wo": jax.random.normal(keys[6], (hidden, hidden), jnp.float32) * s,
        "bo": jnp.zeros((1, hidden), jnp.float32),
        "ln1_g": jnp.ones((1, hidden), jnp.float32),
        "ln1_b": jnp.zeros((1, hidden), jnp.float32),
        "w1": jax.random.normal(keys[7], (hidden, ffn), jnp.float32) * s,
        "b1": jnp.zeros((1, ffn), jnp.float32),
        "w2": jax.random.normal(keys[8], (ffn, hidden), jnp.float32) * s,
        "b2": jnp.zeros((1, hidden), jnp.float32),
        "ln2_g": jnp.ones((1, hidden), jnp.float32),
        "ln2_b": jnp.zeros((1, hidden), jnp.float32),
    }
    if relational:
        p["col_emb"] = jax.random.normal(keys[9], (n_rel, hidden), jnp.float32) * s
        p["row_emb"] = jax.random.normal(keys[10], (n_rel, hidden), jnp.float32) * s
    return p


def prepare_kernel_params(p):
    """Fuse QKV weights and cast matmul weights to bf16 once, ahead of time."""
    kp = dict(p)
    kp["wqkv"] = jnp.concatenate([p["wq"], p["wk"], p["wv"]], axis=1).astype(jnp.bfloat16)
    kp["bqkv"] = jnp.concatenate([p["bq"], p["bk"], p["bv"]], axis=1)   # f32
    kp["wo"] = p["wo"].astype(jnp.bfloat16)
    kp["w1"] = p["w1"].astype(jnp.bfloat16)
    kp["w2"] = p["w2"].astype(jnp.bfloat16)
    return kp


# -------------------------- RelationalBiEncoder ----------------------------- #

class RelationalBiEncoder:
    """JAX/Pallas port: encapsulates question and ctx encoders, returns pooled outs."""

    def __init__(self, q_params, ctx_params, fix_q_encoder=False, fix_ctx_encoder=False):
        self.q_params = prepare_kernel_params(q_params)
        self.ctx_params = prepare_kernel_params(ctx_params)
        # TODO(synk): fix_q_encoder / fix_ctx_encoder stop-gradient logic is a
        # training-time concern with no effect on forward values.
        self.fix_q_encoder = fix_q_encoder
        self.fix_ctx_encoder = fix_ctx_encoder

    @staticmethod
    def _q_embed(p, ids, segments):
        S = ids.shape[1]
        return (jnp.take(p["tok_emb"], ids, axis=0)
                + jnp.take(p["seg_emb"], segments, axis=0)
                + p["pos_emb"][None, :S, :])

    @staticmethod
    def _c_embed(p, ids, segments, column_ids, row_ids):
        S = ids.shape[1]
        return (jnp.take(p["tok_emb"], ids, axis=0)
                + jnp.take(p["seg_emb"], segments, axis=0)
                + p["pos_emb"][None, :S, :]
                + jnp.take(p["col_emb"], column_ids, axis=0)
                + jnp.take(p["row_emb"], row_ids, axis=0))

    def forward(self, question_ids, question_segments, question_attn_mask,
                context_ids, ctx_segments, ctx_attn_mask,
                ctx_column_ids, ctx_row_ids,
                encoder_type=None, representation_token_pos=0):
        q_emb = self._q_embed(self.q_params, question_ids, question_segments)
        q_pooled = run_encoder_layer(q_emb, question_attn_mask, self.q_params,
                                     rep_pos=representation_token_pos)

        c_emb = self._c_embed(self.ctx_params, context_ids, ctx_segments,
                              ctx_column_ids, ctx_row_ids)
        ctx_pooled = run_encoder_layer(c_emb, ctx_attn_mask, self.ctx_params,
                                       rep_pos=representation_token_pos)
        return q_pooled, ctx_pooled


# ---------------------------------- main ------------------------------------ #

if __name__ == "__main__":
    HIDDEN = 128
    FFN = 256
    SEQ = 16
    VOCAB = 1000
    N_SEG = 2
    N_REL = 16
    BQ = 2      # questions per batch
    BC = 4      # contexts per batch (positives + negatives)

    key = jax.random.PRNGKey(0)
    k_qparam, k_cparam, k_qid, k_cid, k_col, k_row = jax.random.split(key, 6)

    q_params = init_encoder_params(k_qparam, HIDDEN, FFN, VOCAB, N_SEG, SEQ,
                                   relational=False)
    ctx_params = init_encoder_params(k_cparam, HIDDEN, FFN, VOCAB, N_SEG, SEQ,
                                     relational=True, n_rel=N_REL)

    question_ids = jax.random.randint(k_qid, (BQ, SEQ), 0, VOCAB, jnp.int32)
    question_segments = jnp.zeros((BQ, SEQ), jnp.int32)
    question_attn_mask = jnp.concatenate(
        [jnp.ones((BQ, SEQ - 2), jnp.float32), jnp.zeros((BQ, 2), jnp.float32)], axis=1)

    context_ids = jax.random.randint(k_cid, (BC, SEQ), 0, VOCAB, jnp.int32)
    ctx_segments = jnp.zeros((BC, SEQ), jnp.int32)
    ctx_attn_mask = jnp.ones((BC, SEQ), jnp.float32)
    ctx_column_ids = jax.random.randint(k_col, (BC, SEQ), 0, N_REL, jnp.int32)
    ctx_row_ids = jax.random.randint(k_row, (BC, SEQ), 0, N_REL, jnp.int32)

    model = RelationalBiEncoder(q_params, ctx_params)
    q_pooled, ctx_pooled = model.forward(
        question_ids, question_segments, question_attn_mask,
        context_ids, ctx_segments, ctx_attn_mask,
        ctx_column_ids, ctx_row_ids,
        representation_token_pos=0)

    jax.block_until_ready((q_pooled, ctx_pooled))
    assert q_pooled.shape == (BQ, HIDDEN) and ctx_pooled.shape == (BC, HIDDEN)
    assert bool(jnp.all(jnp.isfinite(q_pooled))) and bool(jnp.all(jnp.isfinite(ctx_pooled)))
    print("KERNEL_OK")
</pallas_src>

<mosaic_0001>
module attributes {stable_mosaic.version = 11 : i64} {
  func.func @encoder_layer_kernel(%arg0: i32, %arg1: memref<1x16x128xf32, #tpu.memory_space<vmem>>, %arg2: memref<1x1x16xf32, #tpu.memory_space<vmem>>, %arg3: memref<128x384xbf16, #tpu.memory_space<vmem>>, %arg4: memref<1x384xf32, #tpu.memory_space<vmem>>, %arg5: memref<128x128xbf16, #tpu.memory_space<vmem>>, %arg6: memref<1x128xf32, #tpu.memory_space<vmem>>, %arg7: memref<1x128xf32, #tpu.memory_space<vmem>>, %arg8: memref<1x128xf32, #tpu.memory_space<vmem>>, %arg9: memref<128x256xbf16, #tpu.memory_space<vmem>>, %arg10: memref<1x256xf32, #tpu.memory_space<vmem>>, %arg11: memref<256x128xbf16, #tpu.memory_space<vmem>>, %arg12: memref<1x128xf32, #tpu.memory_space<vmem>>, %arg13: memref<1x128xf32, #tpu.memory_space<vmem>>, %arg14: memref<1x128xf32, #tpu.memory_space<vmem>>, %arg15: memref<1x1x128xf32, #tpu.memory_space<vmem>>) attributes {dimension_semantics = [#tpu.dimension_semantics<parallel>], iteration_bounds = array<i64: 2>, scalar_prefetch = 0 : i64, scratch_operands = 0 : i64, tpu.core_type = #tpu.core_type<tc>, window_params = [{transform_indices = @transform_0, window_bounds = array<i64: 1, 16, 128>}, {transform_indices = @transform_1, window_bounds = array<i64: 1, 1, 16>}, {pipeline_mode = #tpu.pipeline_mode<synchronous>, transform_indices = @transform_2, window_bounds = array<i64: 128, 384>}, {pipeline_mode = #tpu.pipeline_mode<synchronous>, transform_indices = @transform_3, window_bounds = array<i64: 1, 384>}, {pipeline_mode = #tpu.pipeline_mode<synchronous>, transform_indices = @transform_4, window_bounds = array<i64: 128, 128>}, {pipeline_mode = #tpu.pipeline_mode<synchronous>, transform_indices = @transform_5, window_bounds = array<i64: 1, 128>}, {pipeline_mode = #tpu.pipeline_mode<synchronous>, transform_indices = @transform_6, window_bounds = array<i64: 1, 128>}, {pipeline_mode = #tpu.pipeline_mode<synchronous>, transform_indices = @transform_7, window_bounds = array<i64: 1, 128>}, {pipeline_mode = #tpu.pipeline_mode<synchronous>, transform_indices = @transform_8, window_bounds = array<i64: 128, 256>}, {pipeline_mode = #tpu.pipeline_mode<synchronous>, transform_indices = @transform_9, window_bounds = array<i64: 1, 256>}, {pipeline_mode = #tpu.pipeline_mode<synchronous>, transform_indices = @transform_10, window_bounds = array<i64: 256, 128>}, {pipeline_mode = #tpu.pipeline_mode<synchronous>, transform_indices = @transform_11, window_bounds = array<i64: 1, 128>}, {pipeline_mode = #tpu.pipeline_mode<synchronous>, transform_indices = @transform_12, window_bounds = array<i64: 1, 128>}, {pipeline_mode = #tpu.pipeline_mode<synchronous>, transform_indices = @transform_13, window_bounds = array<i64: 1, 128>}, {transform_indices = @transform_14, window_bounds = array<i64: 1, 1, 128>}]} {
    %c0 = arith.constant 0 : index
    %c0_0 = arith.constant 0 : index
    %c0_1 = arith.constant 0 : index
    %0 = vector.load %arg1[%c0, %c0_0, %c0_1] : memref<1x16x128xf32, #tpu.memory_space<vmem>>, vector<1x16x128xf32>
    %c0_2 = arith.constant 0 : index
    %c0_3 = arith.constant 0 : index
    %c0_4 = arith.constant 0 : index
    %1 = vector.load %arg2[%c0_2, %c0_3, %c0_4] : memref<1x1x16xf32, #tpu.memory_space<vmem>>, vector<1x1x16xf32>
    %2 = vector.shape_cast %0 : vector<1x16x128xf32> to vector<16x128xf32>
    %3 = arith.truncf %2 : vector<16x128xf32> to vector<16x128xbf16>
    %c0_5 = arith.constant 0 : index
    %c0_6 = arith.constant 0 : index
    %4 = vector.load %arg3[%c0_5, %c0_6] : memref<128x384xbf16, #tpu.memory_space<vmem>>, vector<128x384xbf16>
    %cst = arith.constant dense<0.000000e+00> : vector<16x384xf32>
    %5 = tpu.matmul %3, %4, %cst {dimension_numbers = #tpu.dot_dimension_numbers<[1], [0], [0], [1], [0, 0, 1, 1], [], []>} : vector<16x128xbf16>, vector<128x384xbf16>, vector<16x384xf32> -> vector<16x384xf32>
    %c0_7 = arith.constant 0 : index
    %c0_8 = arith.constant 0 : index
    %6 = vector.load %arg4[%c0_7, %c0_8] : memref<1x384xf32, #tpu.memory_space<vmem>>, vector<1x384xf32>
    %7 = vector.broadcast %6 : vector<1x384xf32> to vector<16x384xf32>
    %8 = arith.addf %5, %7 : vector<16x384xf32>
    %9 = vector.extract_strided_slice %8 {offsets = [0, 0], sizes = [16, 128], strides = [1, 1]} : vector<16x384xf32> to vector<16x128xf32>
    %10 = vector.shape_cast %9 : vector<16x128xf32> to vector<1x16x128xf32>
    %11 = arith.truncf %10 : vector<1x16x128xf32> to vector<1x16x128xbf16>
    %12 = vector.extract_strided_slice %8 {offsets = [0, 128], sizes = [16, 128], strides = [1, 1]} : vector<16x384xf32> to vector<16x128xf32>
    %13 = vector.shape_cast %12 : vector<16x128xf32> to vector<1x16x128xf32>
    %14 = arith.truncf %13 : vector<1x16x128xf32> to vector<1x16x128xbf16>
    %15 = vector.extract_strided_slice %8 {offsets = [0, 256], sizes = [16, 128], strides = [1, 1]} : vector<16x384xf32> to vector<16x128xf32>
    %16 = vector.shape_cast %15 : vector<16x128xf32> to vector<1x16x128xf32>
    %17 = arith.truncf %16 : vector<1x16x128xf32> to vector<1x16x128xbf16>
    "tpu.trace_start"() <{level = 10 : i32, message = "bqd,bkd->bqk"}> : () -> ()
    %cst_9 = arith.constant dense<0.000000e+00> : vector<1x16x16xf32>
    %18 = tpu.matmul %11, %14, %cst_9 {dimension_numbers = #tpu.dot_dimension_numbers<[2], [2], [1], [1], [0, 0, 0, 1, 1, 1], [0], [0]>} : vector<1x16x128xbf16>, vector<1x16x128xbf16>, vector<1x16x16xf32> -> vector<1x16x16xf32>
    "tpu.trace_stop"() : () -> ()
    %cst_10 = arith.constant 0.0883883461 : f32
    %19 = vector.broadcast %cst_10 : f32 to vector<1x16x16xf32>
    %20 = arith.mulf %18, %19 : vector<1x16x16xf32>
    %21 = vector.broadcast %1 : vector<1x1x16xf32> to vector<1x16x16xf32>
    %22 = arith.addf %20, %21 : vector<1x16x16xf32>
    %cst_11 = arith.constant dense<0xFF800000> : vector<1x16xf32>
    %23 = vector.multi_reduction <maximumf>, %22, %cst_11 [2] : vector<1x16x16xf32> to vector<1x16xf32>
    %24 = vector.shape_cast %23 : vector<1x16xf32> to vector<1x16x1xf32>
    %25 = vector.broadcast %24 : vector<1x16x1xf32> to vector<1x16x16xf32>
    %26 = arith.subf %22, %25 : vector<1x16x16xf32>
    %27 = math.exp %26 : vector<1x16x16xf32>
    %cst_12 = arith.constant dense<0.000000e+00> : vector<1x16xf32>
    %28 = vector.multi_reduction <add>, %27, %cst_12 [2] : vector<1x16x16xf32> to vector<1x16xf32>
    %29 = vector.shape_cast %28 : vector<1x16xf32> to vector<1x16x1xf32>
    %30 = tpu.reciprocal %29 {approx = true} : vector<1x16x1xf32> -> vector<1x16x1xf32>
    %31 = vector.broadcast %30 : vector<1x16x1xf32> to vector<1x16x16xf32>
    %32 = arith.mulf %27, %31 : vector<1x16x16xf32>
    %33 = arith.truncf %32 : vector<1x16x16xf32> to vector<1x16x16xbf16>
    "tpu.trace_start"() <{level = 10 : i32, message = "bqk,bkd->bqd"}> : () -> ()
    %cst_13 = arith.constant dense<0.000000e+00> : vector<1x16x128xf32>
    %34 = tpu.matmul %33, %17, %cst_13 {dimension_numbers = #tpu.dot_dimension_numbers<[2], [1], [1], [2], [0, 0, 0, 1, 1, 2], [0], [0]>} : vector<1x16x16xbf16>, vector<1x16x128xbf16>, vector<1x16x128xf32> -> vector<1x16x128xf32>
    "tpu.trace_stop"() : () -> ()
    %35 = vector.shape_cast %34 : vector<1x16x128xf32> to vector<16x128xf32>
    %36 = arith.truncf %35 : vector<16x128xf32> to vector<16x128xbf16>
    %c0_14 = arith.constant 0 : index
    %c0_15 = arith.constant 0 : index
    %37 = vector.load %arg5[%c0_14, %c0_15] : memref<128x128xbf16, #tpu.memory_space<vmem>>, vector<128x128xbf16>
    %cst_16 = arith.constant dense<0.000000e+00> : vector<16x128xf32>
    %38 = tpu.matmul %36, %37, %cst_16 {dimension_numbers = #tpu.dot_dimension_numbers<[1], [0], [0], [1], [0, 0, 1, 1], [], []>} : vector<16x128xbf16>, vector<128x128xbf16>, vector<16x128xf32> -> vector<16x128xf32>
    %c0_17 = arith.constant 0 : index
    %c0_18 = arith.constant 0 : index
    %39 = vector.load %arg6[%c0_17, %c0_18] : memref<1x128xf32, #tpu.memory_space<vmem>>, vector<1x128xf32>
    %40 = vector.broadcast %39 : vector<1x128xf32> to vector<16x128xf32>
    %41 = arith.addf %38, %40 : vector<16x128xf32>
    %42 = arith.addf %2, %41 : vector<16x128xf32>
    %c0_19 = arith.constant 0 : index
    %c0_20 = arith.constant 0 : index
    %43 = vector.load %arg7[%c0_19, %c0_20] : memref<1x128xf32, #tpu.memory_space<vmem>>, vector<1x128xf32>
    %c0_21 = arith.constant 0 : index
    %c0_22 = arith.constant 0 : index
    %44 = vector.load %arg8[%c0_21, %c0_22] : memref<1x128xf32, #tpu.memory_space<vmem>>, vector<1x128xf32>
    %cst_23 = arith.constant dense<0.000000e+00> : vector<16xf32>
    %45 = vector.multi_reduction <add>, %42, %cst_23 [1] : vector<16x128xf32> to vector<16xf32>
    %46 = vector.shape_cast %45 : vector<16xf32> to vector<16x1xf32>
    %cst_24 = arith.constant 1.280000e+02 : f32
    %47 = vector.broadcast %cst_24 : f32 to vector<16x1xf32>
    %48 = arith.divf %46, %47 : vector<16x1xf32>
    %49 = vector.broadcast %48 : vector<16x1xf32> to vector<16x128xf32>
    %50 = arith.subf %42, %49 : vector<16x128xf32>
    %51 = arith.mulf %50, %50 : vector<16x128xf32>
    %cst_25 = arith.constant dense<0.000000e+00> : vector<16xf32>
    %52 = vector.multi_reduction <add>, %51, %cst_25 [1] : vector<16x128xf32> to vector<16xf32>
    %53 = vector.shape_cast %52 : vector<16xf32> to vector<16x1xf32>
    %cst_26 = arith.constant 1.280000e+02 : f32
    %54 = vector.broadcast %cst_26 : f32 to vector<16x1xf32>
    %55 = arith.divf %53, %54 : vector<16x1xf32>
    %56 = vector.broadcast %48 : vector<16x1xf32> to vector<16x128xf32>
    %57 = arith.subf %42, %56 : vector<16x128xf32>
    %cst_27 = arith.constant 9.99999996E-13 : f32
    %58 = vector.broadcast %cst_27 : f32 to vector<16x1xf32>
    %59 = arith.addf %55, %58 : vector<16x1xf32>
    %60 = math.rsqrt %59 : vector<16x1xf32>
    %61 = vector.broadcast %60 : vector<16x1xf32> to vector<16x128xf32>
    %62 = arith.mulf %57, %61 : vector<16x128xf32>
    %63 = vector.broadcast %43 : vector<1x128xf32> to vector<16x128xf32>
    %64 = arith.mulf %62, %63 : vector<16x128xf32>
    %65 = vector.broadcast %44 : vector<1x128xf32> to vector<16x128xf32>
    %66 = arith.addf %64, %65 : vector<16x128xf32>
    %67 = arith.truncf %66 : vector<16x128xf32> to vector<16x128xbf16>
    %c0_28 = arith.constant 0 : index
    %c0_29 = arith.constant 0 : index
    %68 = vector.load %arg9[%c0_28, %c0_29] : memref<128x256xbf16, #tpu.memory_space<vmem>>, vector<128x256xbf16>
    %cst_30 = arith.constant dense<0.000000e+00> : vector<16x256xf32>
    %69 = tpu.matmul %67, %68, %cst_30 {dimension_numbers = #tpu.dot_dimension_numbers<[1], [0], [0], [1], [0, 0, 1, 1], [], []>} : vector<16x128xbf16>, vector<128x256xbf16>, vector<16x256xf32> -> vector<16x256xf32>
    %c0_31 = arith.constant 0 : index
    %c0_32 = arith.constant 0 : index
    %70 = vector.load %arg10[%c0_31, %c0_32] : memref<1x256xf32, #tpu.memory_space<vmem>>, vector<1x256xf32>
    %71 = vector.broadcast %70 : vector<1x256xf32> to vector<16x256xf32>
    %72 = arith.addf %69, %71 : vector<16x256xf32>
    %cst_33 = arith.constant 5.000000e-01 : f32
    %73 = vector.broadcast %cst_33 : f32 to vector<16x256xf32>
    %74 = arith.mulf %73, %72 : vector<16x256xf32>
    %cst_34 = arith.constant 4.471500e-02 : f32
    %75 = vector.broadcast %cst_34 : f32 to vector<16x256xf32>
    %76 = arith.mulf %75, %72 : vector<16x256xf32>
    %77 = arith.mulf %76, %72 : vector<16x256xf32>
    %78 = arith.mulf %77, %72 : vector<16x256xf32>
    %79 = arith.addf %72, %78 : vector<16x256xf32>
    %cst_35 = arith.constant 0.797884583 : f32
    %80 = vector.broadcast %cst_35 : f32 to vector<16x256xf32>
    %81 = arith.mulf %80, %79 : vector<16x256xf32>
    %82 = math.tanh %81 : vector<16x256xf32>
    %cst_36 = arith.constant 1.000000e+00 : f32
    %83 = vector.broadcast %cst_36 : f32 to vector<16x256xf32>
    %84 = arith.addf %83, %82 : vector<16x256xf32>
    %85 = arith.mulf %74, %84 : vector<16x256xf32>
    %86 = arith.truncf %85 : vector<16x256xf32> to vector<16x256xbf16>
    %c0_37 = arith.constant 0 : index
    %c0_38 = arith.constant 0 : index
    %87 = vector.load %arg11[%c0_37, %c0_38] : memref<256x128xbf16, #tpu.memory_space<vmem>>, vector<256x128xbf16>
    %cst_39 = arith.constant dense<0.000000e+00> : vector<16x128xf32>
    %88 = tpu.matmul %86, %87, %cst_39 {dimension_numbers = #tpu.dot_dimension_numbers<[1], [0], [0], [1], [0, 0, 1, 1], [], []>} : vector<16x256xbf16>, vector<256x128xbf16>, vector<16x128xf32> -> vector<16x128xf32>
    %c0_40 = arith.constant 0 : index
    %c0_41 = arith.constant 0 : index
    %89 = vector.load %arg12[%c0_40, %c0_41] : memref<1x128xf32, #tpu.memory_space<vmem>>, vector<1x128xf32>
    %90 = vector.broadcast %89 : vector<1x128xf32> to vector<16x128xf32>
    %91 = arith.addf %88, %90 : vector<16x128xf32>
    %92 = arith.addf %66, %91 : vector<16x128xf32>
    %c0_42 = arith.constant 0 : index
    %c0_43 = arith.constant 0 : index
    %93 = vector.load %arg13[%c0_42, %c0_43] : memref<1x128xf32, #tpu.memory_space<vmem>>, vector<1x128xf32>
    %c0_44 = arith.constant 0 : index
    %c0_45 = arith.constant 0 : index
    %94 = vector.load %arg14[%c0_44, %c0_45] : memref<1x128xf32, #tpu.memory_space<vmem>>, vector<1x128xf32>
    %cst_46 = arith.constant dense<0.000000e+00> : vector<16xf32>
    %95 = vector.multi_reduction <add>, %92, %cst_46 [1] : vector<16x128xf32> to vector<16xf32>
    %96 = vector.shape_cast %95 : vector<16xf32> to vector<16x1xf32>
    %cst_47 = arith.constant 1.280000e+02 : f32
    %97 = vector.broadcast %cst_47 : f32 to vector<16x1xf32>
    %98 = arith.divf %96, %97 : vector<16x1xf32>
    %99 = vector.broadcast %98 : vector<16x1xf32> to vector<16x128xf32>
    %100 = arith.subf %92, %99 : vector<16x128xf32>
    %101 = arith.mulf %100, %100 : vector<16x128xf32>
    %cst_48 = arith.constant dense<0.000000e+00> : vector<16xf32>
    %102 = vector.multi_reduction <add>, %101, %cst_48 [1] : vector<16x128xf32> to vector<16xf32>
    %103 = vector.shape_cast %102 : vector<16xf32> to vector<16x1xf32>
    %cst_49 = arith.constant 1.280000e+02 : f32
    %104 = vector.broadcast %cst_49 : f32 to vector<16x1xf32>
    %105 = arith.divf %103, %104 : vector<16x1xf32>
    %106 = vector.broadcast %98 : vector<16x1xf32> to vector<16x128xf32>
    %107 = arith.subf %92, %106 : vector<16x128xf32>
    %cst_50 = arith.constant 9.99999996E-13 : f32
    %108 = vector.broadcast %cst_50 : f32 to vector<16x1xf32>
    %109 = arith.addf %105, %108 : vector<16x1xf32>
    %110 = math.rsqrt %109 : vector<16x1xf32>
    %111 = vector.broadcast %110 : vector<16x1xf32> to vector<16x128xf32>
    %112 = arith.mulf %107, %111 : vector<16x128xf32>
    %113 = vector.broadcast %93 : vector<1x128xf32> to vector<16x128xf32>
    %114 = arith.mulf %112, %113 : vector<16x128xf32>
    %115 = vector.broadcast %94 : vector<1x128xf32> to vector<16x128xf32>
    %116 = arith.addf %114, %115 : vector<16x128xf32>
    %117 = vector.shape_cast %116 : vector<16x128xf32> to vector<1x16x128xf32>
    %118 = vector.extract_strided_slice %117 {offsets = [0, 0, 0], sizes = [1, 1, 128], strides = [1, 1, 1]} : vector<1x16x128xf32> to vector<1x1x128xf32>
    %c0_51 = arith.constant 0 : index
    %c0_52 = arith.constant 0 : index
    %c0_53 = arith.constant 0 : index
    %119 = vector.load %arg15[%c0_51, %c0_52, %c0_53] : memref<1x1x128xf32, #tpu.memory_space<vmem>>, vector<1x1x128xf32>
    tpu.vector_store %arg15[%c0_51, %c0_52, %c0_53], %118 {strides = array<i32>} : memref<1x1x128xf32, #tpu.memory_space<vmem>>, vector<1x1x128xf32>,
    return
  }
  func.func @transform_0(%arg0: i32) -> (i32, i32, i32) {
    %c0_i32 = arith.constant 0 : i32
    %c0_i32_0 = arith.constant 0 : i32
    %c0_i32_1 = arith.constant 0 : i32
    return %arg0, %c0_i32, %c0_i32_0 : i32, i32, i32
  }
  func.func @transform_1(%arg0: i32) -> (i32, i32, i32) {
    %c0_i32 = arith.constant 0 : i32
    %c0_i32_0 = arith.constant 0 : i32
    %c0_i32_1 = arith.constant 0 : i32
    return %arg0, %c0_i32, %c0_i32_0 : i32, i32, i32
  }
  func.func @transform_2(%arg0: i32) -> (i32, i32) {
    %c0_i32 = arith.constant 0 : i32
    %c0_i32_0 = arith.constant 0 : i32
    %c0_i32_1 = arith.constant 0 : i32
    return %c0_i32, %c0_i32_0 : i32, i32
  }
  func.func @transform_3(%arg0: i32) -> (i32, i32) {
    %c0_i32 = arith.constant 0 : i32
    %c0_i32_0 = arith.constant 0 : i32
    %c0_i32_1 = arith.constant 0 : i32
    return %c0_i32, %c0_i32_0 : i32, i32
  }
  func.func @transform_4(%arg0: i32) -> (i32, i32) {
    %c0_i32 = arith.constant 0 : i32
    %c0_i32_0 = arith.constant 0 : i32
    %c0_i32_1 = arith.constant 0 : i32
    return %c0_i32, %c0_i32_0 : i32, i32
  }
  func.func @transform_5(%arg0: i32) -> (i32, i32) {
    %c0_i32 = arith.constant 0 : i32
    %c0_i32_0 = arith.constant 0 : i32
    %c0_i32_1 = arith.constant 0 : i32
    return %c0_i32, %c0_i32_0 : i32, i32
  }
  func.func @transform_6(%arg0: i32) -> (i32, i32) {
    %c0_i32 = arith.constant 0 : i32
    %c0_i32_0 = arith.constant 0 : i32
    %c0_i32_1 = arith.constant 0 : i32
    return %c0_i32, %c0_i32_0 : i32, i32
  }
  func.func @transform_7(%arg0: i32) -> (i32, i32) {
    %c0_i32 = arith.constant 0 : i32
    %c0_i32_0 = arith.constant 0 : i32
    %c0_i32_1 = arith.constant 0 : i32
    return %c0_i32, %c0_i32_0 : i32, i32
  }
  func.func @transform_8(%arg0: i32) -> (i32, i32) {
    %c0_i32 = arith.constant 0 : i32
    %c0_i32_0 = arith.constant 0 : i32
    %c0_i32_1 = arith.constant 0 : i32
    return %c0_i32, %c0_i32_0 : i32, i32
  }
  func.func @transform_9(%arg0: i32) -> (i32, i32) {
    %c0_i32 = arith.constant 0 : i32
    %c0_i32_0 = arith.constant 0 : i32
    %c0_i32_1 = arith.constant 0 : i32
    return %c0_i32, %c0_i32_0 : i32, i32
  }
  func.func @transform_10(%arg0: i32) -> (i32, i32) {
    %c0_i32 = arith.constant 0 : i32
    %c0_i32_0 = arith.constant 0 : i32
    %c0_i32_1 = arith.constant 0 : i32
    return %c0_i32, %c0_i32_0 : i32, i32
  }
  func.func @transform_11(%arg0: i32) -> (i32, i32) {
    %c0_i32 = arith.constant 0 : i32
    %c0_i32_0 = arith.constant 0 : i32
    %c0_i32_1 = arith.constant 0 : i32
    return %c0_i32, %c0_i32_0 : i32, i32
  }
  func.func @transform_12(%arg0: i32) -> (i32, i32) {
    %c0_i32 = arith.constant 0 : i32
    %c0_i32_0 = arith.constant 0 : i32
    %c0_i32_1 = arith.constant 0 : i32
    return %c0_i32, %c0_i32_0 : i32, i32
  }
  func.func @transform_13(%arg0: i32) -> (i32, i32) {
    %c0_i32 = arith.constant 0 : i32
    %c0_i32_0 = arith.constant 0 : i32
    %c0_i32_1 = arith.constant 0 : i32
    return %c0_i32, %c0_i32_0 : i32, i32
  }
  func.func @transform_14(%arg0: i32) -> (i32, i32, i32) {
    %c0_i32 = arith.constant 0 : i32
    %c0_i32_0 = arith.constant 0 : i32
    %c0_i32_1 = arith.constant 0 : i32
    return %arg0, %c0_i32, %c0_i32_0 : i32, i32, i32
  }
}

</mosaic_0001>

<llo_original>
// kernel: tpu_custom_call.1
$region0: #{tpu_custom_call.1}
  #allocation0 [shape = 'u32[]', space=smem, size = 0x4, offset = 0x4, fixed_abs, tag = 'smem constant byte address 0x4 - core index']
  #allocation1 [shape = 'u32[144,128]{1,0:T(1,128)}', space=vmem, size = 0x12000, scoped, tag = 'internal scratch']
  %s0 = inlined_call_operand.hbm [shape: f32[2,16,128], index: 0, kind: input, shape index: {}]
  %s1 = inlined_call_operand.hbm [shape: f32[2,1,16], index: 1, kind: input, shape index: {}]
  %s2 = inlined_call_operand.hbm [shape: bf16[128,384], index: 2, kind: input, shape index: {}]
  %s3 = inlined_call_operand.hbm [shape: f32[1,384], index: 3, kind: input, shape index: {}]
  %s4 = inlined_call_operand.hbm [shape: bf16[128,128], index: 4, kind: input, shape index: {}]
  %s5 = inlined_call_operand.hbm [shape: f32[1,128], index: 5, kind: input, shape index: {}]
  %s6 = inlined_call_operand.hbm [shape: f32[1,128], index: 6, kind: input, shape index: {}]
  %s7 = inlined_call_operand.hbm [shape: f32[1,128], index: 7, kind: input, shape index: {}]
  %s8 = inlined_call_operand.hbm [shape: bf16[128,256], index: 8, kind: input, shape index: {}]
  %s9 = inlined_call_operand.hbm [shape: f32[1,256], index: 9, kind: input, shape index: {}]
  %s10 = inlined_call_operand.hbm [shape: bf16[256,128], index: 10, kind: input, shape index: {}]
  %s11 = inlined_call_operand.hbm [shape: f32[1,128], index: 11, kind: input, shape index: {}]
  %s12 = inlined_call_operand.hbm [shape: f32[1,128], index: 12, kind: input, shape index: {}]
  %s13 = inlined_call_operand.hbm [shape: f32[1,128], index: 13, kind: input, shape index: {}]
  %s14 = inlined_call_operand.hbm [shape: f32[2,1,128], index: 14, kind: output, shape index: {}]
  %s15 = sld [smem:[#allocation0]]
  $region145: #{tpu_custom_call.1} parent=0
    _
  %s17 = ssub.s32 1, %s15
  %s18 = scalar_select 0, %s17, %s15
  $region1: #{tpu_custom_call.1} parent=0
    #allocation2 [shape = 'u8[16384]{0}', space=vmem, size = 0x4000, scoped, tag = 'input window, operand 0']
    #allocation3 [shape = 's32[2]{0}', space=sflag, size = 0x8, scoped, tag = 'scoped memory for tpu_custom_call.1']
    #allocation4 [shape = 's32[2]{0}', space=sflag, size = 0x8, scoped, tag = 'scoped memory for tpu_custom_call.1']
    #allocation5 [shape = 'u8[1024]{0}', space=vmem, size = 0x400, scoped, tag = 'input window, operand 1']
    #allocation6 [shape = 's32[2]{0}', space=sflag, size = 0x8, scoped, tag = 'scoped memory for tpu_custom_call.1']
    #allocation7 [shape = 'u8[98304]{0}', space=vmem, size = 0x18000, scoped, tag = 'input window, operand 2, single buffered']
    #allocation8 [shape = 'u8[1536]{0}', space=vmem, size = 0x800, scoped, tag = 'input window, operand 3, single buffered']
    #allocation9 [shape = 's32[1]{0}', space=sflag, size = 0x4, scoped, tag = 'scoped memory for tpu_custom_call.1']
    #allocation10 [shape = 'u8[32768]{0}', space=vmem, size = 0x8000, scoped, tag = 'input window, operand 4, single buffered']
    #allocation11 [shape = 'u8[512]{0}', space=vmem, size = 0x400, scoped, tag = 'input window, operand 5, single buffered']
    #allocation12 [shape = 's32[1]{0}', space=sflag, size = 0x4, scoped, tag = 'scoped memory for tpu_custom_call.1']
    #allocation13 [shape = 'u8[512]{0}', space=vmem, size = 0x400, scoped, tag = 'input window, operand 6, single buffered']
    #allocation14 [shape = 'u8[512]{0}', space=vmem, size = 0x400, scoped, tag = 'input window, operand 7, single buffered']
    #allocation15 [shape = 's32[1]{0}', space=sflag, size = 0x4, scoped, tag = 'scoped memory for tpu_custom_call.1']
    #allocation16 [shape = 'u8[65536]{0}', space=vmem, size = 0x10000, scoped, tag = 'input window, operand 8, single buffered']
    #allocation17 [shape = 'u8[1024]{0}', space=vmem, size = 0x400, scoped, tag = 'input window, operand 9, single buffered']
    #allocation18 [shape = 's32[1]{0}', space=sflag, size = 0x4, scoped, tag = 'scoped memory for tpu_custom_call.1']
    #allocation19 [shape = 'u8[65536]{0}', space=vmem, size = 0x10000, scoped, tag = 'input window, operand 10, single buffered']
    #allocation20 [shape = 'u8[512]{0}', space=vmem, size = 0x400, scoped, tag = 'input window, operand 11, single buffered']
    #allocation21 [shape = 's32[1]{0}', space=sflag, size = 0x4, scoped, tag = 'scoped memory for tpu_custom_call.1']
    #allocation22 [shape = 'u8[512]{0}', space=vmem, size = 0x400, scoped, tag = 'input window, operand 12, single buffered']
    #allocation23 [shape = 'u8[512]{0}', space=vmem, size = 0x400, scoped, tag = 'input window, operand 13, single buffered']
    #allocation24 [shape = 's32[1]{0}', space=sflag, size = 0x4, scoped, tag = 'scoped memory for tpu_custom_call.1']
    #allocation25 [shape = 'u8[1024]{0}', space=vmem, size = 0x400, scoped, tag = 'output window, operand 0']
    %19 = vsyncpa [#allocation3], 0
    %s20 = scalar_lea.sflag [#allocation3], 1
    %21 = vsyncpa %s20, 0
    %22 = vsyncpa [#allocation6], 0
    %s23 = scalar_lea.sflag [#allocation6], 1
    %24 = vsyncpa %s23, 0
    %25 = vsyncpa [#allocation9], 0
    %26 = vsyncpa [#allocation12], 0
    %27 = vsyncpa [#allocation15], 0
    %28 = vsyncpa [#allocation18], 0
    %29 = vsyncpa [#allocation21], 0
    %30 = vsyncpa [#allocation24], 0
    %31 = vsyncpa [#allocation4], 0
    %s32 = scalar_lea.sflag [#allocation4], 1
    %33 = vsyncpa %s32, 0
    loop: start=0, step=1, limit=4
    $region2: #{tpu_custom_call.1} parent=1 // loop_pre_header
      _
    $region3: #{tpu_custom_call.1} parent=1 // loop_header
      %s35 = sphi 0, %s39
      %p36 = scmp.ge.s32.totalorder %s35, 4
      %s45 = sphi 0, %s47
      %s48 = sphi 0, %s45
      %s49 = sphi 0, %s48
      %s65 = sphi 0, %s49
      %s71 = sphi 0, %s73
      %s74 = sphi 0, %s71
      %s75 = sphi 0, %s74
      %s91 = sphi 0, %s75
      %s95 = sphi 0, %s95
      %s97 = sphi 0, %s95
      %s98 = sphi 0, %s97
      %s112 = sphi 0, %s98
      %s116 = sphi 0, %s116
      %s118 = sphi 0, %s116
      %s119 = sphi 0, %s118
      %s133 = sphi 0, %s119
      %s137 = sphi 0, %s137
      %s139 = sphi 0, %s137
      %s140 = sphi 0, %s139
      %s154 = sphi 0, %s140
      %s158 = sphi 0, %s158
      %s160 = sphi 0, %s158
      %s161 = sphi 0, %s160
      %s175 = sphi 0, %s161
      %s179 = sphi 0, %s179
      %s181 = sphi 0, %s179
      %s182 = sphi 0, %s181
      %s196 = sphi 0, %s182
      %s200 = sphi 0, %s200
      %s202 = sphi 0, %s200
      %s203 = sphi 0, %s202
      %s217 = sphi 0, %s203
      %s221 = sphi 0, %s221
      %s223 = sphi 0, %s221
      %s224 = sphi 0, %s223
      %s238 = sphi 0, %s224
      %s242 = sphi 0, %s242
      %s244 = sphi 0, %s242
      %s245 = sphi 0, %s244
      %s259 = sphi 0, %s245
      %s263 = sphi 0, %s263
      %s265 = sphi 0, %s263
      %s266 = sphi 0, %s265
      %s280 = sphi 0, %s266
      %s284 = sphi 0, %s284
      %s286 = sphi 0, %s284
      %s287 = sphi 0, %s286
      %s301 = sphi 0, %s287
      %s305 = sphi 0, %s305
      %s307 = sphi 0, %s305
      %s308 = sphi 0, %s307
      %s322 = sphi 0, %s308
      %s326 = sphi 0, %s326
      %s328 = sphi 0, %s326
      %s329 = sphi 0, %s328
      %s343 = sphi 0, %s329
      %s349 = sphi 0, %s351
      %s352 = sphi 0, %s349
      %s353 = sphi 0, %s352
      %s369 = sphi 0, %s353
    $region4: #{tpu_custom_call.1} parent=1 // loop_header_branch
      %38 = sbr.rel (%p36) target = $region8
    $region5: #{tpu_custom_call.1} parent=1 // loop_body
      %s40 = ssub.s32 %s35, 1
      %s41 = ssub.s32 %s35, 2
      %s42 = sadd.s32 %s35, 1
      %s43 = ssub.s32 %s35, %s42
      %p44 = scmp.eq.s32.totalorder %s43, 0
      %s46 = sadd.s32 %s45, 1
      %s47 = scalar_select %p44, %s45, %s46
      %p50 = pneg %p44
      %p51 = scmp.eq.s32.totalorder %s35, 1
      %p52 = por %p50, %p51
      %p53 = scmp.ne.s32.totalorder %s45, %s48
      %p54 = scmp.eq.s32.totalorder %s35, 0
      %p55 = por %p53, %p54
      %p56 = scmp.ne.s32.totalorder %s45, %s48
      %p57 = scmp.eq.s32.totalorder %s40, 1
      %p58 = por %p56, %p57
      %p59 = scmp.ne.s32.totalorder %s48, %s49
      %p60 = scmp.eq.s32.totalorder %s40, 0
      %p61 = por %p59, %p60
      %p62 = scmp.ne.s32.totalorder %s48, %s49
      %p63 = scmp.eq.s32.totalorder %s41, 1
      %p64 = por %p62, %p63
      %p66 = scmp.ne.s32.totalorder %s49, %s65
      %p67 = scmp.eq.s32.totalorder %s41, 0
      %p68 = por %p66, %p67
      %s69 = ssub.s32 %s35, %s42
      %p70 = scmp.eq.s32.totalorder %s69, 0
      %s72 = sadd.s32 %s71, 1
      %s73 = scalar_select %p70, %s71, %s72
      %p76 = pneg %p70
      %p77 = scmp.eq.s32.totalorder %s35, 1
      %p78 = por %p76, %p77
      %p79 = scmp.ne.s32.totalorder %s71, %s74
      %p80 = scmp.eq.s32.totalorder %s35, 0
      %p81 = por %p79, %p80
      %p82 = scmp.ne.s32.totalorder %s71, %s74
      %p83 = scmp.eq.s32.totalorder %s40, 1
      %p84 = por %p82, %p83
      %p85 = scmp.ne.s32.totalorder %s74, %s75
      %p86 = scmp.eq.s32.totalorder %s40, 0
      %p87 = por %p85, %p86
      %p88 = scmp.ne.s32.totalorder %s74, %s75
      %p89 = scmp.eq.s32.totalorder %s41, 1
      %p90 = por %p88, %p89
      %p92 = scmp.ne.s32.totalorder %s75, %s91
      %p93 = scmp.eq.s32.totalorder %s41, 0
      %p94 = por %p92, %p93
      %s96 = sadd.s32 %s95, 1
      %p99 = scmp.eq.s32.totalorder %s35, 1
      %p100 = scmp.ne.s32.totalorder %s95, %s97
      %p101 = scmp.eq.s32.totalorder %s35, 0
      %p102 = por %p100, %p101
      %p103 = scmp.ne.s32.totalorder %s95, %s97
      %p104 = scmp.eq.s32.totalorder %s40, 1
      %p105 = por %p103, %p104
      %p106 = scmp.ne.s32.totalorder %s97, %s98
      %p107 = scmp.eq.s32.totalorder %s40, 0
      %p108 = por %p106, %p107
      %p109 = scmp.ne.s32.totalorder %s97, %s98
      %p110 = scmp.eq.s32.totalorder %s41, 1
      %p111 = por %p109, %p110
      %p113 = scmp.ne.s32.totalorder %s98, %s112
      %p114 = scmp.eq.s32.totalorder %s41, 0
      %p115 = por %p113, %p114
      %s117 = sadd.s32 %s116, 1
      %p120 = scmp.eq.s32.totalorder %s35, 1
      %p121 = scmp.ne.s32.totalorder %s116, %s118
      %p122 = scmp.eq.s32.totalorder %s35, 0
      %p123 = por %p121, %p122
      %p124 = scmp.ne.s32.totalorder %s116, %s118
      %p125 = scmp.eq.s32.totalorder %s40, 1
      %p126 = por %p124, %p125
      %p127 = scmp.ne.s32.totalorder %s118, %s119
      %p128 = scmp.eq.s32.totalorder %s40, 0
      %p129 = por %p127, %p128
      %p130 = scmp.ne.s32.totalorder %s118, %s119
      %p131 = scmp.eq.s32.totalorder %s41, 1
      %p132 = por %p130, %p131
      %p134 = scmp.ne.s32.totalorder %s119, %s133
      %p135 = scmp.eq.s32.totalorder %s41, 0
      %p136 = por %p134, %p135
      %s138 = sadd.s32 %s137, 1
      %p141 = scmp.eq.s32.totalorder %s35, 1
      %p142 = scmp.ne.s32.totalorder %s137, %s139
      %p143 = scmp.eq.s32.totalorder %s35, 0
      %p144 = por %p142, %p143
      %p145 = scmp.ne.s32.totalorder %s137, %s139
      %p146 = scmp.eq.s32.totalorder %s40, 1
      %p147 = por %p145, %p146
      %p148 = scmp.ne.s32.totalorder %s139, %s140
      %p149 = scmp.eq.s32.totalorder %s40, 0
      %p150 = por %p148, %p149
      %p151 = scmp.ne.s32.totalorder %s139, %s140
      %p152 = scmp.eq.s32.totalorder %s41, 1
      %p153 = por %p151, %p152
      %p155 = scmp.ne.s32.totalorder %s140, %s154
      %p156 = scmp.eq.s32.totalorder %s41, 0
      %p157 = por %p155, %p156
      %s159 = sadd.s32 %s158, 1
      %p162 = scmp.eq.s32.totalorder %s35, 1
      %p163 = scmp.ne.s32.totalorder %s158, %s160
      %p164 = scmp.eq.s32.totalorder %s35, 0
      %p165 = por %p163, %p164
      %p166 = scmp.ne.s32.totalorder %s158, %s160
      %p167 = scmp.eq.s32.totalorder %s40, 1
      %p168 = por %p166, %p167
      %p169 = scmp.ne.s32.totalorder %s160, %s161
      %p170 = scmp.eq.s32.totalorder %s40, 0
      %p171 = por %p169, %p170
      %p172 = scmp.ne.s32.totalorder %s160, %s161
      %p173 = scmp.eq.s32.totalorder %s41, 1
      %p174 = por %p172, %p173
      %p176 = scmp.ne.s32.totalorder %s161, %s175
      %p177 = scmp.eq.s32.totalorder %s41, 0
      %p178 = por %p176, %p177
      %s180 = sadd.s32 %s179, 1
      %p183 = scmp.eq.s32.totalorder %s35, 1
      %p184 = scmp.ne.s32.totalorder %s179, %s181
      %p185 = scmp.eq.s32.totalorder %s35, 0
      %p186 = por %p184, %p185
      %p187 = scmp.ne.s32.totalorder %s179, %s181
      %p188 = scmp.eq.s32.totalorder %s40, 1
      %p189 = por %p187, %p188
      %p190 = scmp.ne.s32.totalorder %s181, %s182
      %p191 = scmp.eq.s32.totalorder %s40, 0
      %p192 = por %p190, %p191
      %p193 = scmp.ne.s32.totalorder %s181, %s182
      %p194 = scmp.eq.s32.totalorder %s41, 1
      %p195 = por %p193, %p194
      %p197 = scmp.ne.s32.totalorder %s182, %s196
      %p198 = scmp.eq.s32.totalorder %s41, 0
      %p199 = por %p197, %p198
      %s201 = sadd.s32 %s200, 1
      %p204 = scmp.eq.s32.totalorder %s35, 1
      %p205 = scmp.ne.s32.totalorder %s200, %s202
      %p206 = scmp.eq.s32.totalorder %s35, 0
      %p207 = por %p205, %p206
      %p208 = scmp.ne.s32.totalorder %s200, %s202
      %p209 = scmp.eq.s32.totalorder %s40, 1
      %p210 = por %p208, %p209
      %p211 = scmp.ne.s32.totalorder %s202, %s203
      %p212 = scmp.eq.s32.totalorder %s40, 0
      %p213 = por %p211, %p212
      %p214 = scmp.ne.s32.totalorder %s202, %s203
      %p215 = scmp.eq.s32.totalorder %s41, 1
      %p216 = por %p214, %p215
      %p218 = scmp.ne.s32.totalorder %s203, %s217
      %p219 = scmp.eq.s32.totalorder %s41, 0
      %p220 = por %p218, %p219
      %s222 = sadd.s32 %s221, 1
      %p225 = scmp.eq.s32.totalorder %s35, 1
      %p226 = scmp.ne.s32.totalorder %s221, %s223
      %p227 = scmp.eq.s32.totalorder %s35, 0
      %p228 = por %p226, %p227
      %p229 = scmp.ne.s32.totalorder %s221, %s223
      %p230 = scmp.eq.s32.totalorder %s40, 1
      %p231 = por %p229, %p230
      %p232 = scmp.ne.s32.totalorder %s223, %s224
      %p233 = scmp.eq.s32.totalorder %s40, 0
      %p234 = por %p232, %p233
      %p235 = scmp.ne.s32.totalorder %s223, %s224
      %p236 = scmp.eq.s32.totalorder %s41, 1
      %p237 = por %p235, %p236
      %p239 = scmp.ne.s32.totalorder %s224, %s238
      %p240 = scmp.eq.s32.totalorder %s41, 0
      %p241 = por %p239, %p240
      %s243 = sadd.s32 %s242, 1
      %p246 = scmp.eq.s32.totalorder %s35, 1
      %p247 = scmp.ne.s32.totalorder %s242, %s244
      %p248 = scmp.eq.s32.totalorder %s35, 0
      %p249 = por %p247, %p248
      %p250 = scmp.ne.s32.totalorder %s242, %s244
      %p251 = scmp.eq.s32.totalorder %s40, 1
      %p252 = por %p250, %p251
      %p253 = scmp.ne.s32.totalorder %s244, %s245
      %p254 = scmp.eq.s32.totalorder %s40, 0
      %p255 = por %p253, %p254
      %p256 = scmp.ne.s32.totalorder %s244, %s245
      %p257 = scmp.eq.s32.totalorder %s41, 1
      %p258 = por %p256, %p257
      %p260 = scmp.ne.s32.totalorder %s245, %s259
      %p261 = scmp.eq.s32.totalorder %s41, 0
      %p262 = por %p260, %p261
      %s264 = sadd.s32 %s263, 1
      %p267 = scmp.eq.s32.totalorder %s35, 1
      %p268 = scmp.ne.s32.totalorder %s263, %s265
      %p269 = scmp.eq.s32.totalorder %s35, 0
      %p270 = por %p268, %p269
      %p271 = scmp.ne.s32.totalorder %s263, %s265
      %p272 = scmp.eq.s32.totalorder %s40, 1
      %p273 = por %p271, %p272
      %p274 = scmp.ne.s32.totalorder %s265, %s266
      %p275 = scmp.eq.s32.totalorder %s40, 0
      %p276 = por %p274, %p275
      %p277 = scmp.ne.s32.totalorder %s265, %s266
      %p278 = scmp.eq.s32.totalorder %s41, 1
      %p279 = por %p277, %p278
      %p281 = scmp.ne.s32.totalorder %s266, %s280
      %p282 = scmp.eq.s32.totalorder %s41, 0
      %p283 = por %p281, %p282
      %s285 = sadd.s32 %s284, 1
      %p288 = scmp.eq.s32.totalorder %s35, 1
      %p289 = scmp.ne.s32.totalorder %s284, %s286
      %p290 = scmp.eq.s32.totalorder %s35, 0
      %p291 = por %p289, %p290
      %p292 = scmp.ne.s32.totalorder %s284, %s286
      %p293 = scmp.eq.s32.totalorder %s40, 1
      %p294 = por %p292, %p293
      %p295 = scmp.ne.s32.totalorder %s286, %s287
      %p296 = scmp.eq.s32.totalorder %s40, 0
      %p297 = por %p295, %p296
      %p298 = scmp.ne.s32.totalorder %s286, %s287
      %p299 = scmp.eq.s32.totalorder %s41, 1
      %p300 = por %p298, %p299
      %p302 = scmp.ne.s32.totalorder %s287, %s301
      %p303 = scmp.eq.s32.totalorder %s41, 0
      %p304 = por %p302, %p303
      %s306 = sadd.s32 %s305, 1
      %p309 = scmp.eq.s32.totalorder %s35, 1
      %p310 = scmp.ne.s32.totalorder %s305, %s307
      %p311 = scmp.eq.s32.totalorder %s35, 0
      %p312 = por %p310, %p311
      %p313 = scmp.ne.s32.totalorder %s305, %s307
      %p314 = scmp.eq.s32.totalorder %s40, 1
      %p315 = por %p313, %p314
      %p316 = scmp.ne.s32.totalorder %s307, %s308
      %p317 = scmp.eq.s32.totalorder %s40, 0
      %p318 = por %p316, %p317
      %p319 = scmp.ne.s32.totalorder %s307, %s308
      %p320 = scmp.eq.s32.totalorder %s41, 1
      %p321 = por %p319, %p320
      %p323 = scmp.ne.s32.totalorder %s308, %s322
      %p324 = scmp.eq.s32.totalorder %s41, 0
      %p325 = por %p323, %p324
      %s327 = sadd.s32 %s326, 1
      %p330 = scmp.eq.s32.totalorder %s35, 1
      %p331 = scmp.ne.s32.totalorder %s326, %s328
      %p332 = scmp.eq.s32.totalorder %s35, 0
      %p333 = por %p331, %p332
      %p334 = scmp.ne.s32.totalorder %s326, %s328
      %p335 = scmp.eq.s32.totalorder %s40, 1
      %p336 = por %p334, %p335
      %p337 = scmp.ne.s32.totalorder %s328, %s329
      %p338 = scmp.eq.s32.totalorder %s40, 0
      %p339 = por %p337, %p338
      %p340 = scmp.ne.s32.totalorder %s328, %s329
      %p341 = scmp.eq.s32.totalorder %s41, 1
      %p342 = por %p340, %p341
      %p344 = scmp.ne.s32.totalorder %s329, %s343
      %p345 = scmp.eq.s32.totalorder %s41, 0
      %p346 = por %p344, %p345
      %s347 = ssub.s32 %s35, %s42
      %p348 = scmp.eq.s32.totalorder %s347, 0
      %s350 = sadd.s32 %s349, 1
      %s351 = scalar_select %p348, %s349, %s350
      %p354 = pneg %p348
      %p355 = scmp.eq.s32.totalorder %s35, 1
      %p356 = por %p354, %p355
      %p357 = scmp.ne.s32.totalorder %s349, %s352
      %p358 = scmp.eq.s32.totalorder %s35, 0
      %p359 = por %p357, %p358
      %p360 = scmp.ne.s32.totalorder %s349, %s352
      %p361 = scmp.eq.s32.totalorder %s40, 1
      %p362 = por %p360, %p361
      %p363 = scmp.ne.s32.totalorder %s352, %s353
      %p364 = scmp.eq.s32.totalorder %s40, 0
      %p365 = por %p363, %p364
      %p366 = scmp.ne.s32.totalorder %s352, %s353
      %p367 = scmp.eq.s32.totalorder %s41, 1
      %p368 = por %p366, %p367
      %p370 = scmp.ne.s32.totalorder %s353, %s369
      %p371 = scmp.eq.s32.totalorder %s41, 0
      %p372 = por %p370, %p371
      %p373 = scmp.le.s32.totalorder 1, %s35
      %p374 = scmp.lt.s32.totalorder %s35, 3
      %p375 = pnand %p373, %p374
      %p376 = pneg %p375
      // Predicated region
      $region9: #{tpu_custom_call.1} parent=5 // pred_check
        _
      $region10: #{tpu_custom_call.1} parent=5 // pred_check_branch
        %378 = sbr.rel (%p375) target = $region12
      $region11: #{tpu_custom_call.1} parent=5 // pred_region
        %s379 = ssub.s32 %s35, 1
        // Predicated region
        $region13: #{tpu_custom_call.1} parent=11 // pred_check
          %p380 = pneg %p108
        $region14: #{tpu_custom_call.1} parent=11 // pred_check_branch
          %382 = sbr.rel (%p380) target = $region16
        $region15: #{tpu_custom_call.1} parent=11 // pred_region
          %s384 = ssub.s32 3072, 3072
          %385 = vsyncadd [#allocation6], %s384
          %s386 = sshll.u32 [#allocation7], 4
          %s387 = int_to_ptr.vmem [resolvable:$true] %s386
          %392 = dma.hbm_to_vmem [thread:$0]  %s2, 3072, %s387, [#allocation6], 192, 192, 12
        $region16: #{tpu_custom_call.1} parent=11 // pred_fallthru
          _
        // Predicated region
        $region17: #{tpu_custom_call.1} parent=11 // pred_check
          %p393 = pneg %p129
        $region18: #{tpu_custom_call.1} parent=11 // pred_check_branch
          %395 = sbr.rel (%p393) target = $region20
        $region19: #{tpu_custom_call.1} parent=11 // pred_region
          %s397 = ssub.s32 48, 48
          %398 = vsyncadd [#allocation9], %s397
          %s400 = sshll.u32 [#allocation8], 4
          %s401 = int_to_ptr.vmem [resolvable:$true] %s400
          %403 = dma.hbm_to_vmem [thread:$0]  %s3, 48, %s401, [#allocation9]
        $region20: #{tpu_custom_call.1} parent=11 // pred_fallthru
          _
        // Predicated region
        $region21: #{tpu_custom_call.1} parent=11 // pred_check
          %p404 = pneg %p150
        $region22: #{tpu_custom_call.1} parent=11 // pred_check_branch
          %406 = sbr.rel (%p404) target = $region24
        $region23: #{tpu_custom_call.1} parent=11 // pred_region
          %s408 = ssub.s32 1024, 1024
          %409 = vsyncadd [#allocation9], %s408
          %s410 = sshll.u32 [#allocation10], 4
          %s411 = int_to_ptr.vmem [resolvable:$true] %s410
          %416 = dma.hbm_to_vmem [thread:$0]  %s4, 1024, %s411, [#allocation9], 64, 64, 4
        $region24: #{tpu_custom_call.1} parent=11 // pred_fallthru
          _
        // Predicated region
        $region25: #{tpu_custom_call.1} parent=11 // pred_check
          %p417 = pneg %p171
        $region26: #{tpu_custom_call.1} parent=11 // pred_check_branch
          %419 = sbr.rel (%p417) target = $region28
        $region27: #{tpu_custom_call.1} parent=11 // pred_region
          %s421 = ssub.s32 16, 16
          %422 = vsyncadd [#allocation12], %s421
          %s424 = sshll.u32 [#allocation11], 4
          %s425 = int_to_ptr.vmem [resolvable:$true] %s424
          %427 = dma.hbm_to_vmem [thread:$0]  %s5, 16, %s425, [#allocation12]
        $region28: #{tpu_custom_call.1} parent=11 // pred_fallthru
          _
        // Predicated region
        $region29: #{tpu_custom_call.1} parent=11 // pred_check
          %p428 = pneg %p192
        $region30: #{tpu_custom_call.1} parent=11 // pred_check_branch
          %430 = sbr.rel (%p428) target = $region32
        $region31: #{tpu_custom_call.1} parent=11 // pred_region
          %s432 = ssub.s32 16, 16
          %433 = vsyncadd [#allocation12], %s432
          %s435 = sshll.u32 [#allocation13], 4
          %s436 = int_to_ptr.vmem [resolvable:$true] %s435
          %438 = dma.hbm_to_vmem [thread:$0]  %s6, 16, %s436, [#allocation12]
        $region32: #{tpu_custom_call.1} parent=11 // pred_fallthru
          _
        // Predicated region
        $region33: #{tpu_custom_call.1} parent=11 // pred_check
          %p439 = pneg %p213
        $region34: #{tpu_custom_call.1} parent=11 // pred_check_branch
          %441 = sbr.rel (%p439) target = $region36
        $region35: #{tpu_custom_call.1} parent=11 // pred_region
          %s443 = ssub.s32 16, 16
          %444 = vsyncadd [#allocation15], %s443
          %s446 = sshll.u32 [#allocation14], 4
          %s447 = int_to_ptr.vmem [resolvable:$true] %s446
          %449 = dma.hbm_to_vmem [thread:$0]  %s7, 16, %s447, [#allocation15]
        $region36: #{tpu_custom_call.1} parent=11 // pred_fallthru
          _
        // Predicated region
        $region37: #{tpu_custom_call.1} parent=11 // pred_check
          %p450 = pneg %p234
        $region38: #{tpu_custom_call.1} parent=11 // pred_check_branch
          %452 = sbr.rel (%p450) target = $region40
        $region39: #{tpu_custom_call.1} parent=11 // pred_region
          %s454 = ssub.s32 2048, 2048
          %455 = vsyncadd [#allocation15], %s454
          %s456 = sshll.u32 [#allocation16], 4
          %s457 = int_to_ptr.vmem [resolvable:$true] %s456
          %462 = dma.hbm_to_vmem [thread:$0]  %s8, 2048, %s457, [#allocation15], 128, 128, 8
        $region40: #{tpu_custom_call.1} parent=11 // pred_fallthru
          _
        // Predicated region
        $region41: #{tpu_custom_call.1} parent=11 // pred_check
          %p463 = pneg %p255
        $region42: #{tpu_custom_call.1} parent=11 // pred_check_branch
          %465 = sbr.rel (%p463) target = $region44
        $region43: #{tpu_custom_call.1} parent=11 // pred_region
          %s467 = ssub.s32 32, 32
          %468 = vsyncadd [#allocation18], %s467
          %s470 = sshll.u32 [#allocation17], 4
          %s471 = int_to_ptr.vmem [resolvable:$true] %s470
          %473 = dma.hbm_to_vmem [thread:$0]  %s9, 32, %s471, [#allocation18]
        $region44: #{tpu_custom_call.1} parent=11 // pred_fallthru
          _
        // Predicated region
        $region45: #{tpu_custom_call.1} parent=11 // pred_check
          %p474 = pneg %p276
        $region46: #{tpu_custom_call.1} parent=11 // pred_check_branch
          %476 = sbr.rel (%p474) target = $region48
        $region47: #{tpu_custom_call.1} parent=11 // pred_region
          %s478 = ssub.s32 2048, 2048
          %479 = vsyncadd [#allocation18], %s478
          %s480 = sshll.u32 [#allocation19], 4
          %s481 = int_to_ptr.vmem [resolvable:$true] %s480
          %486 = dma.hbm_to_vmem [thread:$0]  %s10, 2048, %s481, [#allocation18], 64, 64, 4
        $region48: #{tpu_custom_call.1} parent=11 // pred_fallthru
          _
        // Predicated region
        $region49: #{tpu_custom_call.1} parent=11 // pred_check
          %p487 = pneg %p297
        $region50: #{tpu_custom_call.1} parent=11 // pred_check_branch
          %489 = sbr.rel (%p487) target = $region52
        $region51: #{tpu_custom_call.1} parent=11 // pred_region
          %s491 = ssub.s32 16, 16
          %492 = vsyncadd [#allocation21], %s491
          %s494 = sshll.u32 [#allocation20], 4
          %s495 = int_to_ptr.vmem [resolvable:$true] %s494
          %497 = dma.hbm_to_vmem [thread:$0]  %s11, 16, %s495, [#allocation21]
        $region52: #{tpu_custom_call.1} parent=11 // pred_fallthru
          _
        // Predicated region
        $region53: #{tpu_custom_call.1} parent=11 // pred_check
          %p498 = pneg %p318
        $region54: #{tpu_custom_call.1} parent=11 // pred_check_branch
          %500 = sbr.rel (%p498) target = $region56
        $region55: #{tpu_custom_call.1} parent=11 // pred_region
          %s502 = ssub.s32 16, 16
          %503 = vsyncadd [#allocation21], %s502
          %s505 = sshll.u32 [#allocation22], 4
          %s506 = int_to_ptr.vmem [resolvable:$true] %s505
          %508 = dma.hbm_to_vmem [thread:$0]  %s12, 16, %s506, [#allocation21]
        $region56: #{tpu_custom_call.1} parent=11 // pred_fallthru
          _
        // Predicated region
        $region57: #{tpu_custom_call.1} parent=11 // pred_check
          %p509 = pneg %p339
        $region58: #{tpu_custom_call.1} parent=11 // pred_check_branch
          %511 = sbr.rel (%p509) target = $region60
        $region59: #{tpu_custom_call.1} parent=11 // pred_region
          %s513 = ssub.s32 16, 16
          %514 = vsyncadd [#allocation24], %s513
          %s516 = sshll.u32 [#allocation23], 4
          %s517 = int_to_ptr.vmem [resolvable:$true] %s516
          %519 = dma.hbm_to_vmem [thread:$0]  %s13, 16, %s517, [#allocation24]
        $region60: #{tpu_custom_call.1} parent=11 // pred_fallthru
          _
      $region12: #{tpu_custom_call.1} parent=5 // pred_fallthru
        _
      %p520 = scmp.lt.s32.totalorder %s35, 2
      // Predicated region
      $region61: #{tpu_custom_call.1} parent=5 // pred_check
        %p521 = pneg %p520
      $region62: #{tpu_custom_call.1} parent=5 // pred_check_branch
        %523 = sbr.rel (%p521) target = $region64
      $region63: #{tpu_custom_call.1} parent=5 // pred_region
        // Predicated region
        $region65: #{tpu_custom_call.1} parent=63 // pred_check
          %p524 = pneg %p55
        $region66: #{tpu_custom_call.1} parent=63 // pred_check_branch
          %526 = sbr.rel (%p524) target = $region68
        $region67: #{tpu_custom_call.1} parent=63 // pred_region
          %s527 = sand.u32 %s45, 1
          %s528 = scalar_lea.sflag [#allocation3], %s527
          %s529 = sand.u32 %s45, 1
          %s530 = smul.addr %s529, 16
          %s531 = scalar_lea.vmem [#allocation2], %s530
          %s533 = ssub.s32 256, 256
          %534 = vsyncadd %s528, %s533
          %s535 = smul.addr %s35, 2
          %s536 = smul.addr %s535, 128
          %s537 = scalar_lea.hbm %s0, %s536
          %s538 = sshll.u32 %s531, 4
          %s539 = int_to_ptr.vmem [resolvable:$true] %s538
          %544 = dma.hbm_to_vmem [thread:$0]  %s537, 256, %s539, %s528, 128, 128, 8
        $region68: #{tpu_custom_call.1} parent=63 // pred_fallthru
          _
        // Predicated region
        $region69: #{tpu_custom_call.1} parent=63 // pred_check
          %p545 = pneg %p81
        $region70: #{tpu_custom_call.1} parent=63 // pred_check_branch
          %547 = sbr.rel (%p545) target = $region72
        $region71: #{tpu_custom_call.1} parent=63 // pred_region
          %s548 = sand.u32 %s35, 1
          %s549 = scalar_lea.sflag [#allocation6], %s548
          %s550 = sand.u32 %s71, 1
          %s551 = scalar_lea.vmem [#allocation5], %s550
          %s553 = ssub.s32 16, 16
          %554 = vsyncadd %s549, %s553
          %s555 = smul.addr %s35, 16
          %s556 = scalar_lea.hbm %s1, %s555
          %s558 = sshll.u32 %s551, 4
          %s559 = int_to_ptr.vmem [resolvable:$true] %s558
          %561 = dma.hbm_to_vmem [thread:$0]  %s556, 16, %s559, %s549
        $region72: #{tpu_custom_call.1} parent=63 // pred_fallthru
          _
      $region64: #{tpu_custom_call.1} parent=5 // pred_fallthru
        _
      %p562 = scmp.le.s32.totalorder 1, %s35
      %p563 = scmp.lt.s32.totalorder %s35, 3
      %p564 = pnand %p562, %p563
      %p565 = pneg %p564
      // Predicated region
      $region73: #{tpu_custom_call.1} parent=5 // pred_check
        _
      $region74: #{tpu_custom_call.1} parent=5 // pred_check_branch
        %567 = sbr.rel (%p564) target = $region76
      $region75: #{tpu_custom_call.1} parent=5 // pred_region
        %s568 = ssub.s32 %s35, 1
        %s569 = sand.u32 %s48, 1
        %s570 = scalar_lea.sflag [#allocation3], %s569
        %s571 = sand.u32 %s48, 1
        %s572 = smul.addr %s571, 16
        %s573 = scalar_lea.vmem [#allocation2], %s572
        // Predicated region
        $region77: #{tpu_custom_call.1} parent=75 // pred_check
          %p574 = pneg %p61
        $region78: #{tpu_custom_call.1} parent=75 // pred_check_branch
          %576 = sbr.rel (%p574) target = $region80
        $region79: #{tpu_custom_call.1} parent=75 // pred_region
          %577 = dma.done %s570, 256
        $region80: #{tpu_custom_call.1} parent=75 // pred_fallthru
          _
        %s578 = sand.u32 %s40, 1
        %s579 = scalar_lea.sflag [#allocation6], %s578
        %s580 = sand.u32 %s74, 1
        %s581 = scalar_lea.vmem [#allocation5], %s580
        // Predicated region
        $region81: #{tpu_custom_call.1} parent=75 // pred_check
          %p582 = pneg %p87
        $region82: #{tpu_custom_call.1} parent=75 // pred_check_branch
          %584 = sbr.rel (%p582) target = $region84
        $region83: #{tpu_custom_call.1} parent=75 // pred_region
          %585 = dma.done %s579, 16
        $region84: #{tpu_custom_call.1} parent=75 // pred_fallthru
          _
        // Predicated region
        $region85: #{tpu_custom_call.1} parent=75 // pred_check
          %p586 = pneg %p108
        $region86: #{tpu_custom_call.1} parent=75 // pred_check_branch
          %588 = sbr.rel (%p586) target = $region88
        $region87: #{tpu_custom_call.1} parent=75 // pred_region
          %589 = dma.done [#allocation6], 3072
        $region88: #{tpu_custom_call.1} parent=75 // pred_fallthru
          _
        // Predicated region
        $region89: #{tpu_custom_call.1} parent=75 // pred_check
          %p590 = pneg %p129
        $region90: #{tpu_custom_call.1} parent=75 // pred_check_branch
          %592 = sbr.rel (%p590) target = $region92
        $region91: #{tpu_custom_call.1} parent=75 // pred_region
          %593 = dma.done [#allocation9], 48
        $region92: #{tpu_custom_call.1} parent=75 // pred_fallthru
          _
        // Predicated region
        $region93: #{tpu_custom_call.1} parent=75 // pred_check
          %p594 = pneg %p150
        $region94: #{tpu_custom_call.1} parent=75 // pred_check_branch
          %596 = sbr.rel (%p594) target = $region96
        $region95: #{tpu_custom_call.1} parent=75 // pred_region
          %597 = dma.done [#allocation9], 1024
        $region96: #{tpu_custom_call.1} parent=75 // pred_fallthru
          _
        // Predicated region
        $region97: #{tpu_custom_call.1} parent=75 // pred_check
          %p598 = pneg %p171
        $region98: #{tpu_custom_call.1} parent=75 // pred_check_branch
          %600 = sbr.rel (%p598) target = $region100
        $region99: #{tpu_custom_call.1} parent=75 // pred_region
          %601 = dma.done [#allocation12], 16
        $region100: #{tpu_custom_call.1} parent=75 // pred_fallthru
          _
        // Predicated region
        $region101: #{tpu_custom_call.1} parent=75 // pred_check
          %p602 = pneg %p192
        $region102: #{tpu_custom_call.1} parent=75 // pred_check_branch
          %604 = sbr.rel (%p602) target = $region104
        $region103: #{tpu_custom_call.1} parent=75 // pred_region
          %605 = dma.done [#allocation12], 16
        $region104: #{tpu_custom_call.1} parent=75 // pred_fallthru
          _
        // Predicated region
        $region105: #{tpu_custom_call.1} parent=75 // pred_check
          %p606 = pneg %p213
        $region106: #{tpu_custom_call.1} parent=75 // pred_check_branch
          %608 = sbr.rel (%p606) target = $region108
        $region107: #{tpu_custom_call.1} parent=75 // pred_region
          %609 = dma.done [#allocation15], 16
        $region108: #{tpu_custom_call.1} parent=75 // pred_fallthru
          _
        // Predicated region
        $region109: #{tpu_custom_call.1} parent=75 // pred_check
          %p610 = pneg %p234
        $region110: #{tpu_custom_call.1} parent=75 // pred_check_branch
          %612 = sbr.rel (%p610) target = $region112
        $region111: #{tpu_custom_call.1} parent=75 // pred_region
          %613 = dma.done [#allocation15], 2048
        $region112: #{tpu_custom_call.1} parent=75 // pred_fallthru
          _
        // Predicated region
        $region113: #{tpu_custom_call.1} parent=75 // pred_check
          %p614 = pneg %p255
        $region114: #{tpu_custom_call.1} parent=75 // pred_check_branch
          %616 = sbr.rel (%p614) target = $region116
        $region115: #{tpu_custom_call.1} parent=75 // pred_region
          %617 = dma.done [#allocation18], 32
        $region116: #{tpu_custom_call.1} parent=75 // pred_fallthru
          _
        // Predicated region
        $region117: #{tpu_custom_call.1} parent=75 // pred_check
          %p618 = pneg %p276
        $region118: #{tpu_custom_call.1} parent=75 // pred_check_branch
          %620 = sbr.rel (%p618) target = $region120
        $region119: #{tpu_custom_call.1} parent=75 // pred_region
          %621 = dma.done [#allocation18], 2048
        $region120: #{tpu_custom_call.1} parent=75 // pred_fallthru
          _
        // Predicated region
        $region121: #{tpu_custom_call.1} parent=75 // pred_check
          %p622 = pneg %p297
        $region122: #{tpu_custom_call.1} parent=75 // pred_check_branch
          %624 = sbr.rel (%p622) target = $region124
        $region123: #{tpu_custom_call.1} parent=75 // pred_region
          %625 = dma.done [#allocation21], 16
        $region124: #{tpu_custom_call.1} parent=75 // pred_fallthru
          _
        // Predicated region
        $region125: #{tpu_custom_call.1} parent=75 // pred_check
          %p626 = pneg %p318
        $region126: #{tpu_custom_call.1} parent=75 // pred_check_branch
          %628 = sbr.rel (%p626) target = $region128
        $region127: #{tpu_custom_call.1} parent=75 // pred_region
          %629 = dma.done [#allocation21], 16
        $region128: #{tpu_custom_call.1} parent=75 // pred_fallthru
          _
        // Predicated region
        $region129: #{tpu_custom_call.1} parent=75 // pred_check
          %p630 = pneg %p339
        $region130: #{tpu_custom_call.1} parent=75 // pred_check_branch
          %632 = sbr.rel (%p630) target = $region132
        $region131: #{tpu_custom_call.1} parent=75 // pred_region
          %633 = dma.done [#allocation24], 16
        $region132: #{tpu_custom_call.1} parent=75 // pred_fallthru
          _
        %s634 = sand.u32 %s48, 1
        %s635 = scalar_lea.sflag [#allocation3], %s634
        %s636 = sand.u32 %s48, 1
        %s637 = smul.addr %s636, 16
        %s638 = scalar_lea.vmem [#allocation2], %s637
        %p639 = pneg %p61
        %p640 = pneg %p58
        %s641 = sand.u32 %s40, 1
        %s642 = scalar_lea.sflag [#allocation6], %s641
        %s643 = sand.u32 %s74, 1
        %s644 = scalar_lea.vmem [#allocation5], %s643
        %p645 = pneg %p87
        %p646 = pneg %p84
        %p647 = pneg %p108
        %p648 = pneg %p105
        %p649 = pneg %p129
        %p650 = pneg %p126
        %p651 = pneg %p150
        %p652 = pneg %p147
        %p653 = pneg %p171
        %p654 = pneg %p168
        %p655 = pneg %p192
        %p656 = pneg %p189
        %p657 = pneg %p213
        %p658 = pneg %p210
        %p659 = pneg %p234
        %p660 = pneg %p231
        %p661 = pneg %p255
        %p662 = pneg %p252
        %p663 = pneg %p276
        %p664 = pneg %p273
        %p665 = pneg %p297
        %p666 = pneg %p294
        %p667 = pneg %p318
        %p668 = pneg %p315
        %p669 = pneg %p339
        %p670 = pneg %p336
        %p671 = pneg %p365
        %p672 = pneg %p362
        %s673 = sand.u32 %s352, 1
        %s674 = scalar_lea.sflag [#allocation4], %s673
        %s675 = sand.u32 %s352, 1
        %s676 = scalar_lea.vmem [#allocation25], %s675
        %v678 = vld [vmem:[%s573] sm:$0xff]
        %v679 = vld [vmem:[%s573 + $0x8] sm:$0xff]
        %v680 = vld [vmem:[%s581] sm:$0x1]
        %v681 = vpack.c.bf16 %v679, %v678
        %v682 = vld [vmem:[#allocation7] sm:$0xff]
        %v683 = vld [vmem:[#allocation7 + $0x8] sm:$0xf]
        %v684 = vld [vmem:[#allocation7 + $0xc] sm:$0xff]
        %v685 = vld [vmem:[#allocation7 + $0x14] sm:$0xf]
        %v686 = vld [vmem:[#allocation7 + $0x18] sm:$0xff]
        %v687 = vld [vmem:[#allocation7 + $0x20] sm:$0xf]
        %v688 = vld [vmem:[#allocation7 + $0x24] sm:$0xff]
        %v689 = vld [vmem:[#allocation7 + $0x2c] sm:$0xf]
        %v690 = vld [vmem:[#allocation7 + $0x30] sm:$0xff]
        %v691 = vld [vmem:[#allocation7 + $0x38] sm:$0xf]
        %v692 = vld [vmem:[#allocation7 + $0x3c] sm:$0xff]
        %v693 = vld [vmem:[#allocation7 + $0x44] sm:$0xf]
        %v694 = vld [vmem:[#allocation7 + $0x48] sm:$0xff]
        %v695 = vld [vmem:[#allocation7 + $0x50] sm:$0xf]
        %v696 = vld [vmem:[#allocation7 + $0x54] sm:$0xff]
        %v697 = vld [vmem:[#allocation7 + $0x5c] sm:$0xf]
        %v698 = vld [vmem:[#allocation7 + $0x60] sm:$0xff]
        %v699 = vld [vmem:[#allocation7 + $0x68] sm:$0xf]
        %v700 = vld [vmem:[#allocation7 + $0x6c] sm:$0xff]
        %v701 = vld [vmem:[#allocation7 + $0x74] sm:$0xf]
        %v702 = vld [vmem:[#allocation7 + $0x78] sm:$0xff]
        %v703 = vld [vmem:[#allocation7 + $0x80] sm:$0xf]
        %v704 = vld [vmem:[#allocation7 + $0x84] sm:$0xff]
        %v705 = vld [vmem:[#allocation7 + $0x8c] sm:$0xf]
        %v706 = vld [vmem:[#allocation7 + $0x90] sm:$0xff]
        %v707 = vld [vmem:[#allocation7 + $0x98] sm:$0xf]
        %v708 = vld [vmem:[#allocation7 + $0x9c] sm:$0xff]
        %v709 = vld [vmem:[#allocation7 + $0xa4] sm:$0xf]
        %v710 = vld [vmem:[#allocation7 + $0xa8] sm:$0xff]
        %v711 = vld [vmem:[#allocation7 + $0xb0] sm:$0xf]
        %v712 = vld [vmem:[#allocation7 + $0xb4] sm:$0xff]
        %v713 = vld [vmem:[#allocation7 + $0xbc] sm:$0xf]
        %v714 = vld [vmem:[#allocation8] sm:$0x7]
        %v716 = vlaneseq
        %v717 = vshrl.u32 %v716, 7
        %v718 = vsub.s32 0, %v717
        %v719 = vrot.slane %v714, %v718
        %v720 = vlaneseq
        %v721 = vshrl.u32 %v720, 7
        %v722 = vsub.s32 1, %v721
        %v723 = vrot.slane %v714, %v722
        %v724 = vlaneseq
        %v725 = vshrl.u32 %v724, 7
        %v726 = vsub.s32 2, %v725
        %v727 = vrot.slane %v714, %v726
        %v763 = vunpack.c.l.b16 %v682
        %v764 = vunpack.c.h.b16 %v682
        %v765 = vunpack.c.l.b16 %v683
        %v766 = vunpack.c.l.b16 %v684
        %v767 = vunpack.c.h.b16 %v684
        %v768 = vunpack.c.l.b16 %v685
        %v769 = vunpack.c.l.b16 %v686
        %v770 = vunpack.c.h.b16 %v686
        %v771 = vunpack.c.l.b16 %v687
        %v772 = vunpack.c.l.b16 %v688
        %v773 = vunpack.c.h.b16 %v688
        %v774 = vunpack.c.l.b16 %v689
        %v775 = vunpack.c.l.b16 %v690
        %v776 = vunpack.c.h.b16 %v690
        %v777 = vunpack.c.l.b16 %v691
        %v778 = vunpack.c.l.b16 %v692
        %v779 = vunpack.c.h.b16 %v692
        %v780 = vunpack.c.l.b16 %v693
        %v781 = vunpack.c.l.b16 %v694
        %v782 = vunpack.c.h.b16 %v694
        %v783 = vunpack.c.l.b16 %v695
        %v784 = vunpack.c.l.b16 %v696
        %v785 = vunpack.c.h.b16 %v696
        %v786 = vunpack.c.l.b16 %v697
        %v787 = vunpack.c.l.b16 %v698
        %v788 = vunpack.c.h.b16 %v698
        %v789 = vunpack.c.l.b16 %v699
        %v790 = vunpack.c.l.b16 %v700
        %v791 = vunpack.c.h.b16 %v700
        %v792 = vunpack.c.l.b16 %v701
        %v793 = vunpack.c.l.b16 %v702
        %v794 = vunpack.c.h.b16 %v702
        %v795 = vunpack.c.l.b16 %v703
        %v796 = vunpack.c.l.b16 %v704
        %v797 = vunpack.c.h.b16 %v704
        %v798 = vunpack.c.l.b16 %v705
        %v799 = vunpack.c.l.b16 %v706
        %v800 = vunpack.c.h.b16 %v706
        %v801 = vunpack.c.l.b16 %v707
        %v802 = vunpack.c.l.b16 %v708
        %v803 = vunpack.c.h.b16 %v708
        %v804 = vunpack.c.l.b16 %v709
        %v805 = vunpack.c.l.b16 %v710
        %v806 = vunpack.c.h.b16 %v710
        %v807 = vunpack.c.l.b16 %v711
        %v808 = vunpack.c.l.b16 %v712
        %v809 = vunpack.c.h.b16 %v712
        %v810 = vunpack.c.l.b16 %v713
        %v811 = vpack.c.b16 %v766, %v763
        %v812 = vpack.c.b16 %v767, %v764
        %v813 = vpack.c.b16 %v768, %v765
        %v814 = vpack.c.b16 %v772, %v769
        %v815 = vpack.c.b16 %v773, %v770
        %v816 = vpack.c.b16 %v774, %v771
        %v817 = vpack.c.b16 %v778, %v775
        %v818 = vpack.c.b16 %v779, %v776
        %v819 = vpack.c.b16 %v780, %v777
        %v820 = vpack.c.b16 %v784, %v781
        %v821 = vpack.c.b16 %v785, %v782
        %v822 = vpack.c.b16 %v786, %v783
        %v823 = vpack.c.b16 %v790, %v787
        %v824 = vpack.c.b16 %v791, %v788
        %v825 = vpack.c.b16 %v792, %v789
        %v826 = vpack.c.b16 %v796, %v793
        %v827 = vpack.c.b16 %v797, %v794
        %v828 = vpack.c.b16 %v798, %v795
        %v829 = vpack.c.b16 %v802, %v799
        %v830 = vpack.c.b16 %v803, %v800
        %v831 = vpack.c.b16 %v804, %v801
        %v832 = vpack.c.b16 %v808, %v805
        %v833 = vpack.c.b16 %v809, %v806
        %v834 = vpack.c.b16 %v810, %v807
        %859 = vmatprep.subr.bf16.mxu0 %v812
        %860 = vmatpush1.bf16.msra.mxu0 %v811
        %861 = vmatprep.subr.bf16.mxu0 %v815
        %862 = vmatpush1.bf16.msra.mxu0 %v814
        %863 = vmatprep.subr.bf16.mxu0 %v818
        %864 = vmatpush1.bf16.msra.mxu0 %v817
        %865 = vmatprep.subr.bf16.mxu0 %v821
        %866 = vmatpush1.bf16.msra.mxu0 %v820
        %867 = vmatprep.subr.bf16.mxu0 %v824
        %868 = vmatpush1.bf16.msra.mxu0 %v823
        %869 = vmatprep.subr.bf16.mxu0 %v827
        %870 = vmatpush1.bf16.msra.mxu0 %v826
        %871 = vmatprep.subr.bf16.mxu0 %v830
        %872 = vmatpush1.bf16.msra.mxu0 %v829
        %873 = vmatprep.subr.bf16.mxu0 %v833
        %874 = vmatpush1.bf16.msra.mxu0 %v832
        %875 = vmatprep.subr.bf16.mxu0 0
        %876 = vmatpush1.bf16.msra.mxu0 0
        %877 = vmatprep.subr.bf16.mxu0 0
        %878 = vmatpush1.bf16.msra.mxu0 0
        %879 = vmatprep.subr.bf16.mxu0 0
        %880 = vmatpush1.bf16.msra.mxu0 0
        %881 = vmatprep.subr.bf16.mxu0 0
        %882 = vmatpush1.bf16.msra.mxu0 0
        %883 = vmatprep.subr.bf16.mxu0 0
        %884 = vmatpush1.bf16.msra.mxu0 0
        %885 = vmatprep.subr.bf16.mxu0 0
        %886 = vmatpush1.bf16.msra.mxu0 0
        %887 = vmatprep.subr.bf16.mxu0 0
        %888 = vmatpush1.bf16.msra.mxu0 0
        %889 = vmatprep.subr.bf16.mxu0 0
        %890 = vmatpush1.bf16.msra.mxu0 0
        %891 = vmatprep.mubr.bf16.mxu0 0
        %892 = vmatmul.mubr.bf16.gmra.mrb[0].mxu0 %v681
        %v893 = vpop.f32.mrb[0].mxu0
        %v894 = vadd.f32 %v719, %v893
        %v895 = vpop.f32.mrb[0].mxu0
        %v896 = vadd.f32 %v723, %v895
        %v897 = vpop.f32.mrb[0].mxu0
        %v898 = vadd.f32 %v719, %v897
        %v899 = vpop.f32.mrb[0].mxu0
        %v900 = vadd.f32 %v723, %v899
        %901 = vdwg.mxu0
        %902 = vmatprep.subr.bf16.mxu0 0
        %903 = vmatpush1.bf16.msra.mxu0 %v813
        %904 = vmatprep.subr.bf16.mxu0 0
        %905 = vmatpush1.bf16.msra.mxu0 %v816
        %906 = vmatprep.subr.bf16.mxu0 0
        %907 = vmatpush1.bf16.msra.mxu0 %v819
        %908 = vmatprep.subr.bf16.mxu0 0
        %909 = vmatpush1.bf16.msra.mxu0 %v822
        %910 = vmatprep.subr.bf16.mxu0 0
        %911 = vmatpush1.bf16.msra.mxu0 %v825
        %912 = vmatprep.subr.bf16.mxu0 0
        %913 = vmatpush1.bf16.msra.mxu0 %v828
        %914 = vmatprep.subr.bf16.mxu0 0
        %915 = vmatpush1.bf16.msra.mxu0 %v831
        %916 = vmatprep.subr.bf16.mxu0 0
        %917 = vmatpush1.bf16.msra.mxu0 %v834
        %918 = vmatprep.subr.bf16.mxu0 0
        %919 = vmatpush1.bf16.msra.mxu0 0
        %920 = vmatprep.subr.bf16.mxu0 0
        %921 = vmatpush1.bf16.msra.mxu0 0
        %922 = vmatprep.subr.bf16.mxu0 0
        %923 = vmatpush1.bf16.msra.mxu0 0
        %924 = vmatprep.subr.bf16.mxu0 0
        %925 = vmatpush1.bf16.msra.mxu0 0
        %926 = vmatprep.subr.bf16.mxu0 0
        %927 = vmatpush1.bf16.msra.mxu0 0
        %928 = vmatprep.subr.bf16.mxu0 0
        %929 = vmatpush1.bf16.msra.mxu0 0
        %930 = vmatprep.subr.bf16.mxu0 0
        %931 = vmatpush1.bf16.msra.mxu0 0
        %932 = vmatprep.subr.bf16.mxu0 0
        %933 = vmatpush1.bf16.msra.mxu0 0
        %934 = vmatprep.mubr.bf16.mxu0 0
        %935 = vmatmul.mubr.bf16.gmra.mrb[0].mxu0 %v681
        %v936 = vpop.f32.mrb[0].mxu0
        %v937 = vadd.f32 %v727, %v936
        %v938 = vpop.f32.mrb[0].mxu0
        %v939 = vpop.f32.mrb[0].mxu0
        %v940 = vadd.f32 %v727, %v939
        %v941 = vpop.f32.mrb[0].mxu0
        %942 = vdwg.mxu0
        %v943 = vpack.c.bf16 %v898, %v894
        %v944 = vpack.c.bf16 %v900, %v896
        %v945 = vpack.c.bf16 %v940, %v937
        %946 = vmatprep.subr.bf16.mxu0 0
        %947 = vmatpush1.bf16.xpose.msra.mxu0 %v944
        %948 = vmatprep.subr.bf16.mxu0 0
        %949 = vmatpush1.bf16.xpose.msra.mxu0 0
        %950 = vmatprep.subr.bf16.mxu0 0
        %951 = vmatpush1.bf16.xpose.msra.mxu0 0
        %952 = vmatprep.subr.bf16.mxu0 0
        %953 = vmatpush1.bf16.xpose.msra.mxu0 0
        %954 = vmatprep.subr.bf16.mxu0 0
        %955 = vmatpush1.bf16.xpose.msra.mxu0 0
        %956 = vmatprep.subr.bf16.mxu0 0
        %957 = vmatpush1.bf16.xpose.msra.mxu0 0
        %958 = vmatprep.subr.bf16.mxu0 0
        %959 = vmatpush1.bf16.xpose.msra.mxu0 0
        %960 = vmatprep.subr.bf16.mxu0 0
        %961 = vmatpush1.bf16.xpose.msra.mxu0 0
        %962 = vmatprep.subr.bf16.mxu0 0
        %963 = vmatpush1.bf16.xpose.msra.mxu0 0
        %964 = vmatprep.subr.bf16.mxu0 0
        %965 = vmatpush1.bf16.xpose.msra.mxu0 0
        %966 = vmatprep.subr.bf16.mxu0 0
        %967 = vmatpush1.bf16.xpose.msra.mxu0 0
        %968 = vmatprep.subr.bf16.mxu0 0
        %969 = vmatpush1.bf16.xpose.msra.mxu0 0
        %970 = vmatprep.subr.bf16.mxu0 0
        %971 = vmatpush1.bf16.xpose.msra.mxu0 0
        %972 = vmatprep.subr.bf16.mxu0 0
        %973 = vmatpush1.bf16.xpose.msra.mxu0 0
        %974 = vmatprep.subr.bf16.mxu0 0
        %975 = vmatpush1.bf16.xpose.msra.mxu0 0
        %976 = vmatprep.subr.bf16.mxu0 0
        %977 = vmatpush1.bf16.xpose.msra.mxu0 0
        %978 = vmatprep.mubr.bf16.mxu0 0
        %979 = vmatmul.mubr.bf16.gmra.mrb[0].mxu0 %v943
        %v980 = vpop.f32.mrb[0].mxu0
        %v981 = vadd.f32 0.0, %v980
        %v982 = vpop.f32.mrb[0].mxu0
        %v983 = vpop.f32.mrb[0].mxu0
        %v984 = vadd.f32 0.0, %v983
        %v985 = vpop.f32.mrb[0].mxu0
        %986 = vdwg.mxu0
        %v987 = vmul.f32 %v981, 0.088388346
        %v988 = vmul.f32 %v984, 0.088388346
        %v990 = vlaneseq
        %v991 = vshrl.u32 %v990, 7
        %v992 = vsub.s32 0, %v991
        %v993 = vrot.slane %v680, %v992
        %v995 = vadd.f32 %v987, %v993
        %v996 = vadd.f32 %v988, %v993
        %vm997 = vcmask 130048
        %v998 = vsel %vm997, %v995, -inf
        %999 = vmax.xlane.f32.xlu0 %v998
        %v1000 = vpop.xlane.xlu0 %999
        %v1001 = vsel %vm997, %v996, -inf
        %1002 = vmax.xlane.f32.xlu0 %v1001
        %v1003 = vpop.xlane.xlu0 %1002
        %v1004 = vsub.f32 %v995, %v1000
        %v1005 = vsub.f32 %v996, %v1003
        %v1006 = vmul.f32 %v1004, 1.442695
        %v1007 = vpow.pop %v1006
        %v1008 = vmul.f32 %v1005, 1.442695
        %v1009 = vpow.pop %v1008
        %v1010 = vsel %vm997, %v1007, 0.0
        %1011 = vadd.xlane.f32.xlu0 %v1010
        %v1012 = vpop.xlane.xlu0 %1011
        %v1013 = vsel %vm997, %v1009, 0.0
        %1014 = vadd.xlane.f32.xlu0 %v1013
        %v1015 = vpop.xlane.xlu0 %1014
        %v1016 = vrcp.pop %v1012
        %v1017 = vrcp.pop %v1015
        %v1018 = vmul.f32 %v1007, %v1016
        %v1019 = vmul.f32 %v1009, %v1017
        %v1020 = vpack.c.bf16 %v1019, %v1018
        %v1022 = vsel %vm997, %v1020, 0
        %1024 = vmatprep.subr.bf16.mxu0 0
        %1025 = vmatpush1.bf16.msra.mxu0 %v945
        %1026 = vmatprep.subr.bf16.mxu0 0
        %1027 = vmatpush1.bf16.msra.mxu0 0
        %1028 = vmatprep.subr.bf16.mxu0 0
        %1029 = vmatpush1.bf16.msra.mxu0 0
        %1030 = vmatprep.subr.bf16.mxu0 0
        %1031 = vmatpush1.bf16.msra.mxu0 0
        %1032 = vmatprep.subr.bf16.mxu0 0
        %1033 = vmatpush1.bf16.msra.mxu0 0
        %1034 = vmatprep.subr.bf16.mxu0 0
        %1035 = vmatpush1.bf16.msra.mxu0 0
        %1036 = vmatprep.subr.bf16.mxu0 0
        %1037 = vmatpush1.bf16.msra.mxu0 0
        %1038 = vmatprep.subr.bf16.mxu0 0
        %1039 = vmatpush1.bf16.msra.mxu0 0
        %1040 = vmatprep.subr.bf16.mxu0 0
        %1041 = vmatpush1.bf16.msra.mxu0 0
        %1042 = vmatprep.subr.bf16.mxu0 0
        %1043 = vmatpush1.bf16.msra.mxu0 0
        %1044 = vmatprep.subr.bf16.mxu0 0
        %1045 = vmatpush1.bf16.msra.mxu0 0
        %1046 = vmatprep.subr.bf16.mxu0 0
        %1047 = vmatpush1.bf16.msra.mxu0 0
        %1048 = vmatprep.subr.bf16.mxu0 0
        %1049 = vmatpush1.bf16.msra.mxu0 0
        %1050 = vmatprep.subr.bf16.mxu0 0
        %1051 = vmatpush1.bf16.msra.mxu0 0
        %1052 = vmatprep.subr.bf16.mxu0 0
        %1053 = vmatpush1.bf16.msra.mxu0 0
        %1054 = vmatprep.subr.bf16.mxu0 0
        %1055 = vmatpush1.bf16.msra.mxu0 0
        %1056 = vmatprep.mubr.bf16.mxu0 0
        %1057 = vmatmul.mubr.bf16.gmra.mrb[0].mxu0 %v1022
        %v1058 = vpop.f32.mrb[0].mxu0
        %v1059 = vadd.f32 0.0, %v1058
        %v1060 = vpop.f32.mrb[0].mxu0
        %v1061 = vpop.f32.mrb[0].mxu0
        %v1062 = vadd.f32 0.0, %v1061
        %v1063 = vpop.f32.mrb[0].mxu0
        %1064 = vdwg.mxu0
        %v1065 = vpack.c.bf16 %v1062, %v1059
        %v1066 = vld [vmem:[#allocation10] sm:$0xf]
        %v1067 = vld [vmem:[#allocation10 + $0x4] sm:$0xf]
        %v1068 = vld [vmem:[#allocation10 + $0x8] sm:$0xf]
        %v1069 = vld [vmem:[#allocation10 + $0xc] sm:$0xf]
        %v1070 = vld [vmem:[#allocation10 + $0x10] sm:$0xf]
        %v1071 = vld [vmem:[#allocation10 + $0x14] sm:$0xf]
        %v1072 = vld [vmem:[#allocation10 + $0x18] sm:$0xf]
        %v1073 = vld [vmem:[#allocation10 + $0x1c] sm:$0xf]
        %v1074 = vld [vmem:[#allocation10 + $0x20] sm:$0xf]
        %v1075 = vld [vmem:[#allocation10 + $0x24] sm:$0xf]
        %v1076 = vld [vmem:[#allocation10 + $0x28] sm:$0xf]
        %v1077 = vld [vmem:[#allocation10 + $0x2c] sm:$0xf]
        %v1078 = vld [vmem:[#allocation10 + $0x30] sm:$0xf]
        %v1079 = vld [vmem:[#allocation10 + $0x34] sm:$0xf]
        %v1080 = vld [vmem:[#allocation10 + $0x38] sm:$0xf]
        %v1081 = vld [vmem:[#allocation10 + $0x3c] sm:$0xf]
        %v1082 = vld [vmem:[#allocation11] sm:$0x1]
        %v1084 = vlaneseq
        %v1085 = vshrl.u32 %v1084, 7
        %v1086 = vsub.s32 0, %v1085
        %v1087 = vrot.slane %v1082, %v1086
        %v1105 = vunpack.c.l.b16 %v1066
        %v1106 = vunpack.c.l.b16 %v1067
        %v1107 = vunpack.c.l.b16 %v1068
        %v1108 = vunpack.c.l.b16 %v1069
        %v1109 = vunpack.c.l.b16 %v1070
        %v1110 = vunpack.c.l.b16 %v1071
        %v1111 = vunpack.c.l.b16 %v1072
        %v1112 = vunpack.c.l.b16 %v1073
        %v1113 = vunpack.c.l.b16 %v1074
        %v1114 = vunpack.c.l.b16 %v1075
        %v1115 = vunpack.c.l.b16 %v1076
        %v1116 = vunpack.c.l.b16 %v1077
        %v1117 = vunpack.c.l.b16 %v1078
        %v1118 = vunpack.c.l.b16 %v1079
        %v1119 = vunpack.c.l.b16 %v1080
        %v1120 = vunpack.c.l.b16 %v1081
        %v1121 = vpack.c.b16 %v1106, %v1105
        %v1122 = vpack.c.b16 %v1108, %v1107
        %v1123 = vpack.c.b16 %v1110, %v1109
        %v1124 = vpack.c.b16 %v1112, %v1111
        %v1125 = vpack.c.b16 %v1114, %v1113
        %v1126 = vpack.c.b16 %v1116, %v1115
        %v1127 = vpack.c.b16 %v1118, %v1117
        %v1128 = vpack.c.b16 %v1120, %v1119
        %1137 = vmatprep.subr.bf16.mxu0 0
        %1138 = vmatpush1.bf16.msra.mxu0 %v1121
        %1139 = vmatprep.subr.bf16.mxu0 0
        %1140 = vmatpush1.bf16.msra.mxu0 %v1122
        %1141 = vmatprep.subr.bf16.mxu0 0
        %1142 = vmatpush1.bf16.msra.mxu0 %v1123
        %1143 = vmatprep.subr.bf16.mxu0 0
        %1144 = vmatpush1.bf16.msra.mxu0 %v1124
        %1145 = vmatprep.subr.bf16.mxu0 0
        %1146 = vmatpush1.bf16.msra.mxu0 %v1125
        %1147 = vmatprep.subr.bf16.mxu0 0
        %1148 = vmatpush1.bf16.msra.mxu0 %v1126
        %1149 = vmatprep.subr.bf16.mxu0 0
        %1150 = vmatpush1.bf16.msra.mxu0 %v1127
        %1151 = vmatprep.subr.bf16.mxu0 0
        %1152 = vmatpush1.bf16.msra.mxu0 %v1128
        %1153 = vmatprep.subr.bf16.mxu0 0
        %1154 = vmatpush1.bf16.msra.mxu0 0
        %1155 = vmatprep.subr.bf16.mxu0 0
        %1156 = vmatpush1.bf16.msra.mxu0 0
        %1157 = vmatprep.subr.bf16.mxu0 0
        %1158 = vmatpush1.bf16.msra.mxu0 0
        %1159 = vmatprep.subr.bf16.mxu0 0
        %1160 = vmatpush1.bf16.msra.mxu0 0
        %1161 = vmatprep.subr.bf16.mxu0 0
        %1162 = vmatpush1.bf16.msra.mxu0 0
        %1163 = vmatprep.subr.bf16.mxu0 0
        %1164 = vmatpush1.bf16.msra.mxu0 0
        %1165 = vmatprep.subr.bf16.mxu0 0
        %1166 = vmatpush1.bf16.msra.mxu0 0
        %1167 = vmatprep.subr.bf16.mxu0 0
        %1168 = vmatpush1.bf16.msra.mxu0 0
        %1169 = vmatprep.mubr.bf16.mxu0 0
        %1170 = vmatmul.mubr.bf16.gmra.mrb[0].mxu0 %v1065
        %v1171 = vpop.f32.mrb[0].mxu0
        %v1172 = vadd.f32 %v1087, %v1171
        %v1173 = vpop.f32.mrb[0].mxu0
        %v1174 = vpop.f32.mrb[0].mxu0
        %v1175 = vadd.f32 %v1087, %v1174
        %v1176 = vpop.f32.mrb[0].mxu0
        %1177 = vdwg.mxu0
        %v1178 = vadd.f32 %v678, %v1172
        %v1179 = vadd.f32 %v679, %v1175
        %v1180 = vld [vmem:[#allocation13] sm:$0x1]
        %v1181 = vld [vmem:[#allocation14] sm:$0x1]
        %1182 = vadd.xlane.f32.xlu0 %v1178
        %v1183 = vpop.xlane.xlu0 %1182
        %1184 = vadd.xlane.f32.xlu0 %v1179
        %v1185 = vpop.xlane.xlu0 %1184
        %v1186 = vrcp.pop 128.0
        %v1187 = vmul.f32 %v1183, %v1186
        %v1188 = vmul.f32 %v1185, %v1186
        %v1189 = vsub.f32 %v1178, %v1187
        %v1190 = vsub.f32 %v1179, %v1188
        %v1191 = vmul.f32 %v1189, %v1189
        %v1192 = vmul.f32 %v1190, %v1190
        %1193 = vadd.xlane.f32.xlu0 %v1191
        %v1194 = vpop.xlane.xlu0 %1193
        %1195 = vadd.xlane.f32.xlu0 %v1192
        %v1196 = vpop.xlane.xlu0 %1195
        %v1197 = vmul.f32 %v1194, %v1186
        %v1198 = vmul.f32 %v1196, %v1186
        %v1199 = vadd.f32 %v1197, 1e-12
        %v1200 = vadd.f32 %v1198, 1e-12
        %v1201 = vrsqrt.pop %v1199
        %v1202 = vrsqrt.pop %v1200
        %v1203 = vmul.f32 %v1189, %v1201
        %v1204 = vmul.f32 %v1190, %v1202
        %v1206 = vlaneseq
        %v1207 = vshrl.u32 %v1206, 7
        %v1208 = vsub.s32 0, %v1207
        %v1209 = vrot.slane %v1180, %v1208
        %v1211 = vmul.f32 %v1203, %v1209
        %v1212 = vmul.f32 %v1204, %v1209
        %v1214 = vlaneseq
        %v1215 = vshrl.u32 %v1214, 7
        %v1216 = vsub.s32 0, %v1215
        %v1217 = vrot.slane %v1181, %v1216
        %v1219 = vadd.f32 %v1211, %v1217
        %v1220 = vadd.f32 %v1212, %v1217
        %v1221 = vpack.c.bf16 %v1220, %v1219
        %v1222 = vld [vmem:[#allocation16] sm:$0xff]
        %v1223 = vld [vmem:[#allocation16 + $0x8] sm:$0xff]
        %v1224 = vld [vmem:[#allocation16 + $0x10] sm:$0xff]
        %v1225 = vld [vmem:[#allocation16 + $0x18] sm:$0xff]
        %v1226 = vld [vmem:[#allocation16 + $0x20] sm:$0xff]
        %v1227 = vld [vmem:[#allocation16 + $0x28] sm:$0xff]
        %v1228 = vld [vmem:[#allocation16 + $0x30] sm:$0xff]
        %v1229 = vld [vmem:[#allocation16 + $0x38] sm:$0xff]
        %v1230 = vld [vmem:[#allocation16 + $0x40] sm:$0xff]
        %v1231 = vld [vmem:[#allocation16 + $0x48] sm:$0xff]
        %v1232 = vld [vmem:[#allocation16 + $0x50] sm:$0xff]
        %v1233 = vld [vmem:[#allocation16 + $0x58] sm:$0xff]
        %v1234 = vld [vmem:[#allocation16 + $0x60] sm:$0xff]
        %v1235 = vld [vmem:[#allocation16 + $0x68] sm:$0xff]
        %v1236 = vld [vmem:[#allocation16 + $0x70] sm:$0xff]
        %v1237 = vld [vmem:[#allocation16 + $0x78] sm:$0xff]
        %v1238 = vld [vmem:[#allocation17] sm:$0x3]
        %v1240 = vlaneseq
        %v1241 = vshrl.u32 %v1240, 7
        %v1242 = vsub.s32 0, %v1241
        %v1243 = vrot.slane %v1238, %v1242
        %v1244 = vlaneseq
        %v1245 = vshrl.u32 %v1244, 7
        %v1246 = vsub.s32 1, %v1245
        %v1247 = vrot.slane %v1238, %v1246
        %v1266 = vunpack.c.l.b16 %v1222
        %v1267 = vunpack.c.h.b16 %v1222
        %v1268 = vunpack.c.l.b16 %v1223
        %v1269 = vunpack.c.h.b16 %v1223
        %v1270 = vunpack.c.l.b16 %v1224
        %v1271 = vunpack.c.h.b16 %v1224
        %v1272 = vunpack.c.l.b16 %v1225
        %v1273 = vunpack.c.h.b16 %v1225
        %v1274 = vunpack.c.l.b16 %v1226
        %v1275 = vunpack.c.h.b16 %v1226
        %v1276 = vunpack.c.l.b16 %v1227
        %v1277 = vunpack.c.h.b16 %v1227
        %v1278 = vunpack.c.l.b16 %v1228
        %v1279 = vunpack.c.h.b16 %v1228
        %v1280 = vunpack.c.l.b16 %v1229
        %v1281 = vunpack.c.h.b16 %v1229
        %v1282 = vunpack.c.l.b16 %v1230
        %v1283 = vunpack.c.h.b16 %v1230
        %v1284 = vunpack.c.l.b16 %v1231
        %v1285 = vunpack.c.h.b16 %v1231
        %v1286 = vunpack.c.l.b16 %v1232
        %v1287 = vunpack.c.h.b16 %v1232
        %v1288 = vunpack.c.l.b16 %v1233
        %v1289 = vunpack.c.h.b16 %v1233
        %v1290 = vunpack.c.l.b16 %v1234
        %v1291 = vunpack.c.h.b16 %v1234
        %v1292 = vunpack.c.l.b16 %v1235
        %v1293 = vunpack.c.h.b16 %v1235
        %v1294 = vunpack.c.l.b16 %v1236
        %v1295 = vunpack.c.h.b16 %v1236
        %v1296 = vunpack.c.l.b16 %v1237
        %v1297 = vunpack.c.h.b16 %v1237
        %v1298 = vpack.c.b16 %v1268, %v1266
        %v1299 = vpack.c.b16 %v1269, %v1267
        %v1300 = vpack.c.b16 %v1272, %v1270
        %v1301 = vpack.c.b16 %v1273, %v1271
        %v1302 = vpack.c.b16 %v1276, %v1274
        %v1303 = vpack.c.b16 %v1277, %v1275
        %v1304 = vpack.c.b16 %v1280, %v1278
        %v1305 = vpack.c.b16 %v1281, %v1279
        %v1306 = vpack.c.b16 %v1284, %v1282
        %v1307 = vpack.c.b16 %v1285, %v1283
        %v1308 = vpack.c.b16 %v1288, %v1286
        %v1309 = vpack.c.b16 %v1289, %v1287
        %v1310 = vpack.c.b16 %v1292, %v1290
        %v1311 = vpack.c.b16 %v1293, %v1291
        %v1312 = vpack.c.b16 %v1296, %v1294
        %v1313 = vpack.c.b16 %v1297, %v1295
        %1330 = vmatprep.subr.bf16.mxu0 %v1299
        %1331 = vmatpush1.bf16.msra.mxu0 %v1298
        %1332 = vmatprep.subr.bf16.mxu0 %v1301
        %1333 = vmatpush1.bf16.msra.mxu0 %v1300
        %1334 = vmatprep.subr.bf16.mxu0 %v1303
        %1335 = vmatpush1.bf16.msra.mxu0 %v1302
        %1336 = vmatprep.subr.bf16.mxu0 %v1305
        %1337 = vmatpush1.bf16.msra.mxu0 %v1304
        %1338 = vmatprep.subr.bf16.mxu0 %v1307
        %1339 = vmatpush1.bf16.msra.mxu0 %v1306
        %1340 = vmatprep.subr.bf16.mxu0 %v1309
        %1341 = vmatpush1.bf16.msra.mxu0 %v1308
        %1342 = vmatprep.subr.bf16.mxu0 %v1311
        %1343 = vmatpush1.bf16.msra.mxu0 %v1310
        %1344 = vmatprep.subr.bf16.mxu0 %v1313
        %1345 = vmatpush1.bf16.msra.mxu0 %v1312
        %1346 = vmatprep.subr.bf16.mxu0 0
        %1347 = vmatpush1.bf16.msra.mxu0 0
        %1348 = vmatprep.subr.bf16.mxu0 0
        %1349 = vmatpush1.bf16.msra.mxu0 0
        %1350 = vmatprep.subr.bf16.mxu0 0
        %1351 = vmatpush1.bf16.msra.mxu0 0
        %1352 = vmatprep.subr.bf16.mxu0 0
        %1353 = vmatpush1.bf16.msra.mxu0 0
        %1354 = vmatprep.subr.bf16.mxu0 0
        %1355 = vmatpush1.bf16.msra.mxu0 0
        %1356 = vmatprep.subr.bf16.mxu0 0
        %1357 = vmatpush1.bf16.msra.mxu0 0
        %1358 = vmatprep.subr.bf16.mxu0 0
        %1359 = vmatpush1.bf16.msra.mxu0 0
        %1360 = vmatprep.subr.bf16.mxu0 0
        %1361 = vmatpush1.bf16.msra.mxu0 0
        %1362 = vmatprep.mubr.bf16.mxu0 0
        %1363 = vmatmul.mubr.bf16.gmra.mrb[0].mxu0 %v1221
        %v1364 = vpop.f32.mrb[0].mxu0
        %v1365 = vadd.f32 %v1243, %v1364
        %v1366 = vpop.f32.mrb[0].mxu0
        %v1367 = vadd.f32 %v1247, %v1366
        %v1368 = vpop.f32.mrb[0].mxu0
        %v1369 = vadd.f32 %v1243, %v1368
        %v1370 = vpop.f32.mrb[0].mxu0
        %v1371 = vadd.f32 %v1247, %v1370
        %1372 = vdwg.mxu0
        %v1373 = vmul.f32 %v1365, 0.5
        %v1374 = vmul.f32 %v1367, 0.5
        %v1375 = vmul.f32 %v1369, 0.5
        %v1376 = vmul.f32 %v1371, 0.5
        %v1377 = vmul.f32 %v1365, 0.044715
        %v1378 = vmul.f32 %v1367, 0.044715
        %v1379 = vmul.f32 %v1369, 0.044715
        %v1380 = vmul.f32 %v1371, 0.044715
        %v1381 = vmul.f32 %v1377, %v1365
        %v1382 = vmul.f32 %v1378, %v1367
        %v1383 = vmul.f32 %v1379, %v1369
        %v1384 = vmul.f32 %v1380, %v1371
        %v1385 = vmul.f32 %v1381, %v1365
        %v1386 = vmul.f32 %v1382, %v1367
        %v1387 = vmul.f32 %v1383, %v1369
        %v1388 = vmul.f32 %v1384, %v1371
        %v1389 = vadd.f32 %v1365, %v1385
        %v1390 = vadd.f32 %v1367, %v1386
        %v1391 = vadd.f32 %v1369, %v1387
        %v1392 = vadd.f32 %v1371, %v1388
        %v1393 = vmul.f32 %v1389, 0.7978846
        %v1394 = vmul.f32 %v1390, 0.7978846
        %v1395 = vmul.f32 %v1391, 0.7978846
        %v1396 = vmul.f32 %v1392, 0.7978846
        %v1397 = vtanh.pop %v1393
        %v1398 = vtanh.pop %v1394
        %v1399 = vtanh.pop %v1395
        %v1400 = vtanh.pop %v1396
        %v1401 = vadd.f32 %v1397, 1.0
        %v1402 = vadd.f32 %v1398, 1.0
        %v1403 = vadd.f32 %v1399, 1.0
        %v1404 = vadd.f32 %v1400, 1.0
        %v1405 = vmul.f32 %v1373, %v1401
        %v1406 = vmul.f32 %v1374, %v1402
        %v1407 = vmul.f32 %v1375, %v1403
        %v1408 = vmul.f32 %v1376, %v1404
        %v1409 = vpack.c.bf16 %v1407, %v1405
        %v1410 = vpack.c.bf16 %v1408, %v1406
        %v1411 = vld [vmem:[#allocation19] sm:$0xf]
        %v1412 = vld [vmem:[#allocation19 + $0x4] sm:$0xf]
        %v1413 = vld [vmem:[#allocation19 + $0x8] sm:$0xf]
        %v1414 = vld [vmem:[#allocation19 + $0xc] sm:$0xf]
        %v1415 = vld [vmem:[#allocation19 + $0x10] sm:$0xf]
        %v1416 = vld [vmem:[#allocation19 + $0x14] sm:$0xf]
        %v1417 = vld [vmem:[#allocation19 + $0x18] sm:$0xf]
        %v1418 = vld [vmem:[#allocation19 + $0x1c] sm:$0xf]
        %v1419 = vld [vmem:[#allocation19 + $0x20] sm:$0xf]
        %v1420 = vld [vmem:[#allocation19 + $0x24] sm:$0xf]
        %v1421 = vld [vmem:[#allocation19 + $0x28] sm:$0xf]
        %v1422 = vld [vmem:[#allocation19 + $0x2c] sm:$0xf]
        %v1423 = vld [vmem:[#allocation19 + $0x30] sm:$0xf]
        %v1424 = vld [vmem:[#allocation19 + $0x34] sm:$0xf]
        %v1425 = vld [vmem:[#allocation19 + $0x38] sm:$0xf]
        %v1426 = vld [vmem:[#allocation19 + $0x3c] sm:$0xf]
        %v1427 = vld [vmem:[#allocation19 + $0x40] sm:$0xf]
        %v1428 = vld [vmem:[#allocation19 + $0x44] sm:$0xf]
        %v1429 = vld [vmem:[#allocation19 + $0x48] sm:$0xf]
        %v1430 = vld [vmem:[#allocation19 + $0x4c] sm:$0xf]
        %v1431 = vld [vmem:[#allocation19 + $0x50] sm:$0xf]
        %v1432 = vld [vmem:[#allocation19 + $0x54] sm:$0xf]
        %v1433 = vld [vmem:[#allocation19 + $0x58] sm:$0xf]
        %v1434 = vld [vmem:[#allocation19 + $0x5c] sm:$0xf]
        %v1435 = vld [vmem:[#allocation19 + $0x60] sm:$0xf]
        %v1436 = vld [vmem:[#allocation19 + $0x64] sm:$0xf]
        %v1437 = vld [vmem:[#allocation19 + $0x68] sm:$0xf]
        %v1438 = vld [vmem:[#allocation19 + $0x6c] sm:$0xf]
        %v1439 = vld [vmem:[#allocation19 + $0x70] sm:$0xf]
        %v1440 = vld [vmem:[#allocation19 + $0x74] sm:$0xf]
        %v1441 = vld [vmem:[#allocation19 + $0x78] sm:$0xf]
        %v1442 = vld [vmem:[#allocation19 + $0x7c] sm:$0xf]
        %v1443 = vld [vmem:[#allocation20] sm:$0x1]
        %v1445 = vlaneseq
        %v1446 = vshrl.u32 %v1445, 7
        %v1447 = vsub.s32 0, %v1446
        %v1448 = vrot.slane %v1443, %v1447
        %v1482 = vunpack.c.l.b16 %v1411
        %v1483 = vunpack.c.l.b16 %v1412
        %v1484 = vunpack.c.l.b16 %v1413
        %v1485 = vunpack.c.l.b16 %v1414
        %v1486 = vunpack.c.l.b16 %v1415
        %v1487 = vunpack.c.l.b16 %v1416
        %v1488 = vunpack.c.l.b16 %v1417
        %v1489 = vunpack.c.l.b16 %v1418
        %v1490 = vunpack.c.l.b16 %v1419
        %v1491 = vunpack.c.l.b16 %v1420
        %v1492 = vunpack.c.l.b16 %v1421
        %v1493 = vunpack.c.l.b16 %v1422
        %v1494 = vunpack.c.l.b16 %v1423
        %v1495 = vunpack.c.l.b16 %v1424
        %v1496 = vunpack.c.l.b16 %v1425
        %v1497 = vunpack.c.l.b16 %v1426
        %v1498 = vunpack.c.l.b16 %v1427
        %v1499 = vunpack.c.l.b16 %v1428
        %v1500 = vunpack.c.l.b16 %v1429
        %v1501 = vunpack.c.l.b16 %v1430
        %v1502 = vunpack.c.l.b16 %v1431
        %v1503 = vunpack.c.l.b16 %v1432
        %v1504 = vunpack.c.l.b16 %v1433
        %v1505 = vunpack.c.l.b16 %v1434
        %v1506 = vunpack.c.l.b16 %v1435
        %v1507 = vunpack.c.l.b16 %v1436
        %v1508 = vunpack.c.l.b16 %v1437
        %v1509 = vunpack.c.l.b16 %v1438
        %v1510 = vunpack.c.l.b16 %v1439
        %v1511 = vunpack.c.l.b16 %v1440
        %v1512 = vunpack.c.l.b16 %v1441
        %v1513 = vunpack.c.l.b16 %v1442
        %v1514 = vpack.c.b16 %v1483, %v1482
        %v1515 = vpack.c.b16 %v1485, %v1484
        %v1516 = vpack.c.b16 %v1487, %v1486
        %v1517 = vpack.c.b16 %v1489, %v1488
        %v1518 = vpack.c.b16 %v1491, %v1490
        %v1519 = vpack.c.b16 %v1493, %v1492
        %v1520 = vpack.c.b16 %v1495, %v1494
        %v1521 = vpack.c.b16 %v1497, %v1496
        %v1522 = vpack.c.b16 %v1499, %v1498
        %v1523 = vpack.c.b16 %v1501, %v1500
        %v1524 = vpack.c.b16 %v1503, %v1502
        %v1525 = vpack.c.b16 %v1505, %v1504
        %v1526 = vpack.c.b16 %v1507, %v1506
        %v1527 = vpack.c.b16 %v1509, %v1508
        %v1528 = vpack.c.b16 %v1511, %v1510
        %v1529 = vpack.c.b16 %v1513, %v1512
        %1546 = vmatprep.subr.bf16.mxu0 0
        %1547 = vmatpush1.bf16.msra.mxu0 %v1514
        %1548 = vmatprep.subr.bf16.mxu0 0
        %1549 = vmatpush1.bf16.msra.mxu0 %v1515
        %1550 = vmatprep.subr.bf16.mxu0 0
        %1551 = vmatpush1.bf16.msra.mxu0 %v1516
        %1552 = vmatprep.subr.bf16.mxu0 0
        %1553 = vmatpush1.bf16.msra.mxu0 %v1517
        %1554 = vmatprep.subr.bf16.mxu0 0
        %1555 = vmatpush1.bf16.msra.mxu0 %v1518
        %1556 = vmatprep.subr.bf16.mxu0 0
        %1557 = vmatpush1.bf16.msra.mxu0 %v1519
        %1558 = vmatprep.subr.bf16.mxu0 0
        %1559 = vmatpush1.bf16.msra.mxu0 %v1520
        %1560 = vmatprep.subr.bf16.mxu0 0
        %1561 = vmatpush1.bf16.msra.mxu0 %v1521
        %1562 = vmatprep.subr.bf16.mxu0 0
        %1563 = vmatpush1.bf16.msra.mxu0 %v1522
        %1564 = vmatprep.subr.bf16.mxu0 0
        %1565 = vmatpush1.bf16.msra.mxu0 %v1523
        %1566 = vmatprep.subr.bf16.mxu0 0
        %1567 = vmatpush1.bf16.msra.mxu0 %v1524
        %1568 = vmatprep.subr.bf16.mxu0 0
        %1569 = vmatpush1.bf16.msra.mxu0 %v1525
        %1570 = vmatprep.subr.bf16.mxu0 0
        %1571 = vmatpush1.bf16.msra.mxu0 %v1526
        %1572 = vmatprep.subr.bf16.mxu0 0
        %1573 = vmatpush1.bf16.msra.mxu0 %v1527
        %1574 = vmatprep.subr.bf16.mxu0 0
        %1575 = vmatpush1.bf16.msra.mxu0 %v1528
        %1576 = vmatprep.subr.bf16.mxu0 0
        %1577 = vmatpush1.bf16.msra.mxu0 %v1529
        %1578 = vmatprep.mubr.bf16.mxu0 %v1410
        %1579 = vmatmul.mubr.bf16.gmra.mrb[0].mxu0 %v1409
        %v1580 = vpop.f32.mrb[0].mxu0
        %v1581 = vadd.f32 %v1448, %v1580
        %v1582 = vpop.f32.mrb[0].mxu0
        %v1583 = vpop.f32.mrb[0].mxu0
        %v1584 = vpop.f32.mrb[0].mxu0
        %1585 = vdwg.mxu0
        %v1586 = vadd.f32 %v1219, %v1581
        %v1587 = vld [vmem:[#allocation22] sm:$0x1]
        %v1588 = vld [vmem:[#allocation23] sm:$0x1]
        %1589 = vadd.xlane.f32.xlu0 %v1586
        %v1590 = vpop.xlane.xlu0 %1589
        %v1591 = vmul.f32 %v1590, %v1186
        %v1592 = vsub.f32 %v1586, %v1591
        %v1593 = vmul.f32 %v1592, %v1592
        %1594 = vadd.xlane.f32.xlu0 %v1593
        %v1595 = vpop.xlane.xlu0 %1594
        %v1596 = vmul.f32 %v1595, %v1186
        %v1597 = vadd.f32 %v1596, 1e-12
        %v1598 = vrsqrt.pop %v1597
        %v1599 = vmul.f32 %v1592, %v1598
        %v1601 = vlaneseq
        %v1602 = vshrl.u32 %v1601, 7
        %v1603 = vsub.s32 0, %v1602
        %v1604 = vrot.slane %v1587, %v1603
        %v1606 = vmul.f32 %v1599, %v1604
        %v1608 = vlaneseq
        %v1609 = vshrl.u32 %v1608, 7
        %v1610 = vsub.s32 0, %v1609
        %v1611 = vrot.slane %v1588, %v1610
        %v1613 = vadd.f32 %v1606, %v1611
        %1614 = vst [vmem:[%s676] sm:$0x1] %v1613
        %s1615 = sand.u32 %s352, 1
        %s1616 = scalar_lea.sflag [#allocation4], %s1615
        %s1617 = sand.u32 %s352, 1
        %s1618 = scalar_lea.vmem [#allocation25], %s1617
        // Predicated region
        $region133: #{tpu_custom_call.1} parent=75 // pred_check
          %p1619 = pneg %p362
        $region134: #{tpu_custom_call.1} parent=75 // pred_check_branch
          %1621 = sbr.rel (%p1619) target = $region136
        $region135: #{tpu_custom_call.1} parent=75 // pred_region
          %s1623 = ssub.s32 16, 16
          %1624 = vsyncadd %s1616, %s1623
          %s1625 = smul.addr %s40, 16
          %s1626 = scalar_lea.hbm %s14, %s1625
          %s1628 = sshll.u32 %s1618, 4
          %s1629 = int_to_ptr.vmem [resolvable:$true] %s1628
          %1631 = dma.vmem_to_hbm [thread:$0]  %s1629, 16, %s1626, %s1616
        $region136: #{tpu_custom_call.1} parent=75 // pred_fallthru
          _
      $region76: #{tpu_custom_call.1} parent=5 // pred_fallthru
        _
      %p1632 = scmp.le.s32.totalorder 2, %s35
      // Predicated region
      $region137: #{tpu_custom_call.1} parent=5 // pred_check
        %p1633 = pneg %p1632
      $region138: #{tpu_custom_call.1} parent=5 // pred_check_branch
        %1635 = sbr.rel (%p1633) target = $region140
      $region139: #{tpu_custom_call.1} parent=5 // pred_region
        %s1636 = ssub.s32 %s35, 2
        // Predicated region
        $region141: #{tpu_custom_call.1} parent=139 // pred_check
          %p1637 = pneg %p368
        $region142: #{tpu_custom_call.1} parent=139 // pred_check_branch
          %1639 = sbr.rel (%p1637) target = $region144
        $region143: #{tpu_custom_call.1} parent=139 // pred_region
          %s1640 = sand.u32 %s353, 1
          %s1641 = scalar_lea.sflag [#allocation4], %s1640
          %s1642 = sand.u32 %s353, 1
          %s1643 = scalar_lea.vmem [#allocation25], %s1642
          %1644 = dma.done %s1641, 16
        $region144: #{tpu_custom_call.1} parent=139 // pred_fallthru
          _
      $region140: #{tpu_custom_call.1} parent=5 // pred_fallthru
        _
    $region6: #{tpu_custom_call.1} parent=1 // loop_footer
      %s39 = sadd.s32 1, %s35
    $region7: #{tpu_custom_call.1} parent=1 // loop_footer_branch
      %34 = sbr.rel target = $region3
    $region8: #{tpu_custom_call.1} parent=1 // loop_exit
      _
    %1645 = vsyncpa [#allocation3], 1
    %s1646 = scalar_lea.sflag [#allocation3], 1
    %1647 = vsyncpa %s1646, 1
    %1648 = vsyncpa [#allocation6], 1
    %s1649 = scalar_lea.sflag [#allocation6], 1
    %1650 = vsyncpa %s1649, 1
    %1651 = vsyncpa [#allocation9], 1
    %1652 = vsyncpa [#allocation12], 1
    %1653 = vsyncpa [#allocation15], 1
    %1654 = vsyncpa [#allocation18], 1
    %1655 = vsyncpa [#allocation21], 1
    %1656 = vsyncpa [#allocation24], 1
    %1657 = vsyncpa [#allocation4], 1
    %s1658 = scalar_lea.sflag [#allocation4], 1
    %1659 = vsyncpa %s1658, 1

</llo_original>
